<compile_context>
chip_gen: v6e
topology: v6e:2x2x1
jax: 0.10.0
libtpu: 0.0.40
codegen_flags: <defaults>
</compile_context>

<pallas_src>
import functools

import jax
import jax.numpy as jnp
from jax.experimental import pallas as pl
from jax.experimental.pallas import tpu as pltpu


NUM_ITERS = 4
BIG = 1e30            # finite "+inf" sentinel for the z-buffer
POINT_CHUNK = 256     # lidar points folded into the z-buffer per grid step


def _round_up(x, m):
    return ((x + m - 1) // m) * m


# ----------------------------------------------------------------------------
# Kernel 1: fused se3.transform + pinhole projection + chunked z-buffer min
# ----------------------------------------------------------------------------

def _depth_kernel(cam_ref, tflat_ref, pcd_ref, out_ref, acc_ref, *,
                  height, width, chunk, n_true):
    b = pl.program_id(0)
    c = pl.program_id(1)
    wp = width + 2
    s = (height + 2) * (width + 2)

    @pl.when(c == 0)
    def _init():
        acc_ref[...] = jnp.full_like(acc_ref, BIG)

    p = pcd_ref[0]                                   # (3, chunk) lane-dense
    x = p[0:1, :]
    y = p[1:2, :]
    z = p[2:3, :]

    # Extrinsics: first 3 rows of the composed T, read as SMEM scalars.
    def T(i, j):
        return tflat_ref[b, i * 4 + j]

    xt = T(0, 0) * x + T(0, 1) * y + T(0, 2) * z + T(0, 3)
    yt = T(1, 0) * x + T(1, 1) * y + T(1, 2) * z + T(1, 3)
    zt = T(2, 0) * x + T(2, 1) * y + T(2, 2) * z + T(2, 3)

    fx = cam_ref[0]
    fy = cam_ref[1]
    cx = cam_ref[2]
    cy = cam_ref[3]

    z_ok = zt > 1e-6
    z_safe = jnp.where(z_ok, zt, 1.0)
    # Exact division for the pixel binning (bounds test / floor are sensitive).
    u = fx * xt / z_safe + cx
    v = fy * yt / z_safe + cy

    pt_idx = c * chunk + jax.lax.broadcasted_iota(jnp.int32, (1, chunk), 1)
    valid = (z_ok
             & (u >= 0.0) & (u < float(width))
             & (v >= 0.0) & (v < float(height))
             & (pt_idx < n_true))                    # mask pad points
    ui = jnp.clip(jnp.floor(u), 0.0, float(width - 1)).astype(jnp.int32)
    vi = jnp.clip(jnp.floor(v), 0.0, float(height - 1)).astype(jnp.int32)
    # Linear pixel index on the zero-padded (height+2, width+2) grid.
    pid = (vi + 1) * wp + (ui + 1)                   # (1, chunk) int32

    pix = jax.lax.broadcasted_iota(jnp.int32, (s, 1), 0)     # (s, 1)
    hit = (pix == pid) & valid                               # (s, chunk)
    acc_ref[...] = jnp.minimum(acc_ref[...], jnp.where(hit, zt, BIG))

    @pl.when(c == pl.num_programs(1) - 1)
    def _finish():
        depth = jnp.min(acc_ref[...], axis=1, keepdims=True)  # (s, 1)
        out_ref[0] = jnp.where(depth >= 0.5 * BIG, 0.0, depth)


def lidar_depth_padded(Tcl, pcd, camera_info):
    """Fused se3.transform(Tcl, pcd) + pinhole projection + z-buffer.

    Returns the depth image on the zero-padded (H+2, W+2) grid, flattened to
    (B, S, 1) with S = (H+2)*(W+2) — exactly the layout the fused encoder
    consumes, so no pad / reshape / transpose sits between the two kernels."""
    B, N, _ = pcd.shape
    H = int(camera_info["height"])
    W = int(camera_info["width"])
    S = (H + 2) * (W + 2)
    chunk = min(POINT_CHUNK, _round_up(N, 128))
    Np = _round_up(N, chunk)
    num_chunks = Np // chunk

    pcd_t = jnp.transpose(pcd, (0, 2, 1)).astype(jnp.float32)     # (B, 3, N)
    if Np != N:
        pcd_t = jnp.pad(pcd_t, ((0, 0), (0, 0), (0, Np - N)))
    cam = jnp.array([camera_info["fx"], camera_info["fy"],
                     camera_info["cx"], camera_info["cy"]], jnp.float32)
    tflat = Tcl.astype(jnp.float32)[:, :3, :].reshape(B, 12)

    return pl.pallas_call(
        functools.partial(_depth_kernel, height=H, width=W, chunk=chunk,
                          n_true=N),
        out_shape=jax.ShapeDtypeStruct((B, S, 1), jnp.float32),
        grid_spec=pltpu.PrefetchScalarGridSpec(
            num_scalar_prefetch=2,
            grid=(B, num_chunks),
            in_specs=[pl.BlockSpec((1, 3, chunk),
                                   lambda b, c, cam, T: (b, 0, c))],
            out_specs=pl.BlockSpec((1, S, 1),
                                   lambda b, c, cam, T: (b, 0, 0)),
            scratch_shapes=[pltpu.VMEM((S, chunk), jnp.float32)]),
        compiler_params=pltpu.CompilerParams(
            dimension_semantics=("parallel", "arbitrary")),
    )(cam, tflat, pcd_t)


# ----------------------------------------------------------------------------
# Kernel 2: fused encoder — channel concat + conv1 + conv2 + GAP + iter head
# ----------------------------------------------------------------------------

def _encoder_kernel(imgp_ref, depthp_ref, mask_ref, w1_ref, b1_ref, w2_ref,
                    b2_ref, wg_ref, wx_ref, bh_ref, out_ref, x1s_ref, x2s_ref,
                    *, s, margin, wp, hw, num_iters):
    mask = mask_ref[...]                              # (s, 1) interior pixels

    def conv3x3(src_ref, wmat, bias):
        # 3x3 / stride-1 / pad-1 conv as shift-im2col over the flattened
        # padded grid: 9 static sublane-shifted slices of the VMEM scratch,
        # one MXU dot, ReLU, then the pad ring is forced back to zero.
        taps = []
        for ki in range(3):
            for kj in range(3):
                off = margin + (ki - 1) * wp + (kj - 1)
                taps.append(src_ref[pl.ds(off, s), :])
        a = jnp.concatenate(taps, axis=-1)            # (s, 9*cin)
        h = jnp.dot(a, wmat, preferred_element_type=jnp.float32) + bias
        return jnp.maximum(h, 0.0) * mask

    # Stage conv1 input in VMEM: img channels 0..2, projected depth channel 3
    # (the img+depth concat never touches HBM).
    x1s_ref[...] = jnp.zeros_like(x1s_ref)
    x1s_ref[pl.ds(margin, s), 0:3] = imgp_ref[0]
    x1s_ref[pl.ds(margin, s), 3:4] = depthp_ref[0]
    h1 = conv3x3(x1s_ref, w1_ref[...], b1_ref[...])   # (s, 8)

    x2s_ref[...] = jnp.zeros_like(x2s_ref)
    x2s_ref[pl.ds(margin, s), :] = h1                 # ring of h1 is already 0
    h2 = conv3x3(x2s_ref, w2_ref[...], b2_ref[...])   # (s, 16)

    # Global average pool over the H*W interior (ring already zeroed).
    g = jnp.sum(h2, axis=0, keepdims=True) * (1.0 / hw)          # (1, 16)

    # RAFT-style iterative refinement head.
    gproj = jnp.dot(g, wg_ref[...], preferred_element_type=jnp.float32)
    bias_h = bh_ref[...]                              # (1, 6)
    x_est = jnp.zeros_like(gproj)                     # (1, 6)
    for it in range(num_iters):                       # static, small
        delta = gproj + jnp.dot(x_est, wx_ref[...],
                                preferred_element_type=jnp.float32) + bias_h
        x_est = x_est + delta
        out_ref[:, it, :] = x_est


def encoder_forward(params, imgp_flat, depth_flat, H, W, num_iters):
    """imgp_flat: (B, S, 3) padded+flattened image; depth_flat: (B, S, 1)."""
    B, S, _ = imgp_flat.shape
    Wp = W + 2
    margin = _round_up(Wp + 1, 8)                     # covers all 9 tap shifts
    hw = float(H * W)

    # Interior (non-pad) pixel mask on the padded grid, built once in XLA.
    rr = jnp.arange(H + 2)
    cc = jnp.arange(Wp)
    inside = (((rr >= 1) & (rr <= H))[:, None]
              & ((cc >= 1) & (cc <= W))[None, :])
    mask = inside.reshape(S, 1).astype(jnp.float32)

    cin1 = params["w1"].shape[1]
    c1 = params["w1"].shape[0]
    c2 = params["w2"].shape[0]
    w1 = jnp.transpose(params["w1"], (2, 3, 1, 0)).reshape(9 * cin1, c1)
    w2 = jnp.transpose(params["w2"], (2, 3, 1, 0)).reshape(9 * c1, c2)
    b1 = params["b1"].astype(jnp.float32).reshape(1, c1)
    b2 = params["b2"].astype(jnp.float32).reshape(1, c2)
    wg = params["wg"].astype(jnp.float32)
    wx = params["wx"].astype(jnp.float32)
    bh = params["bh"].astype(jnp.float32).reshape(1, 6)

    return pl.pallas_call(
        functools.partial(_encoder_kernel, s=S, margin=margin, wp=Wp, hw=hw,
                          num_iters=num_iters),
        out_shape=jax.ShapeDtypeStruct((B, num_iters, 6), jnp.float32),
        grid=(B,),
        in_specs=[
            pl.BlockSpec((1, S, 3), lambda b: (b, 0, 0)),
            pl.BlockSpec((1, S, 1), lambda b: (b, 0, 0)),
            pl.BlockSpec((S, 1), lambda b: (0, 0)),
            pl.BlockSpec((9 * cin1, c1), lambda b: (0, 0)),
            pl.BlockSpec((1, c1), lambda b: (0, 0)),
            pl.BlockSpec((9 * c1, c2), lambda b: (0, 0)),
            pl.BlockSpec((1, c2), lambda b: (0, 0)),
            pl.BlockSpec((c2, 6), lambda b: (0, 0)),
            pl.BlockSpec((6, 6), lambda b: (0, 0)),
            pl.BlockSpec((1, 6), lambda b: (0, 0)),
        ],
        out_specs=pl.BlockSpec((1, num_iters, 6), lambda b: (b, 0, 0)),
        scratch_shapes=[pltpu.VMEM((S + 2 * margin, cin1), jnp.float32),
                        pltpu.VMEM((S + 2 * margin, c1), jnp.float32)],
        compiler_params=pltpu.CompilerParams(
            dimension_semantics=("parallel",)),       # v7x: 2 TCs split batch
    )(imgp_flat, depth_flat, mask, w1, b1, w2, b2, wg, wx, bh)


# ----------------------------------------------------------------------------
# se3.exp / se3.log — tiny batched 4x4 Rodrigues maps, kept as JAX glue
# ----------------------------------------------------------------------------

def _hat(phi):
    x, y, z = phi[..., 0], phi[..., 1], phi[..., 2]
    o = jnp.zeros_like(x)
    return jnp.stack([jnp.stack([o, -z, y], -1),
                      jnp.stack([z, o, -x], -1),
                      jnp.stack([-y, x, o], -1)], -2)


def se3_exp(xi):
    """(B, 6) twist [rho, phi] -> (B, 4, 4) SE(3)."""
    rho, phi = xi[..., :3], xi[..., 3:]
    theta = jnp.linalg.norm(phi, axis=-1)[..., None, None]       # (B,1,1)
    small = theta < 1e-6
    th = jnp.where(small, 1.0, theta)
    th2 = theta * theta
    A = jnp.where(small, 1.0 - th2 / 6.0, jnp.sin(th) / th)
    Bc = jnp.where(small, 0.5 - th2 / 24.0, (1.0 - jnp.cos(th)) / (th * th))
    Cc = jnp.where(small, 1.0 / 6.0 - th2 / 120.0,
                   (th - jnp.sin(th)) / (th * th * th))
    K = _hat(phi)
    K2 = K @ K
    eye = jnp.eye(3, dtype=xi.dtype)
    R = eye + A * K + Bc * K2
    V = eye + Bc * K + Cc * K2
    t = jnp.einsum("bij,bj->bi", V, rho)
    top = jnp.concatenate([R, t[..., None]], axis=-1)            # (B,3,4)
    bot = jnp.broadcast_to(jnp.array([0.0, 0.0, 0.0, 1.0], xi.dtype),
                           (xi.shape[0], 1, 4))
    return jnp.concatenate([top, bot], axis=-2)


def se3_log(T):
    """(B, 4, 4) SE(3) -> (B, 6) twist [rho, phi]."""
    # TODO(synk): no special-casing of rotations near pi (not reached here).
    R = T[..., :3, :3]
    t = T[..., :3, 3]
    tr = R[..., 0, 0] + R[..., 1, 1] + R[..., 2, 2]
    cos_t = jnp.clip((tr - 1.0) * 0.5, -1.0, 1.0)
    theta = jnp.arccos(cos_t)[..., None, None]                   # (B,1,1)
    small = theta < 1e-6
    th = jnp.where(small, 1.0, theta)
    th2 = theta * theta
    coef = jnp.where(small, 0.5 + th2 / 12.0, th / (2.0 * jnp.sin(th)))
    Wsk = coef * (R - jnp.swapaxes(R, -1, -2))
    phi = jnp.stack([Wsk[..., 2, 1], Wsk[..., 0, 2], Wsk[..., 1, 0]], axis=-1)
    K = _hat(phi)
    K2 = K @ K
    D = jnp.where(small, 1.0 / 12.0 + th2 / 720.0,
                  (1.0 - th * jnp.sin(th) / (2.0 * (1.0 - jnp.cos(th))))
                  / (th * th))
    eye = jnp.eye(3, dtype=T.dtype)
    Vinv = eye - 0.5 * K + D * K2
    rho = jnp.einsum("bij,bj->bi", Vinv, t)
    return jnp.concatenate([rho, phi], axis=-1)


# ----------------------------------------------------------------------------
# Model wrappers: LCCRAFT (surrogate encoder) and RAFTDenoiser forward
# ----------------------------------------------------------------------------

def init_params(key):
    k1, k2, k3, k4 = jax.random.split(key, 4)
    return {
        "w1": 0.1 * jax.random.normal(k1, (8, 4, 3, 3), jnp.float32),
        "b1": jnp.zeros((8,), jnp.float32),
        "w2": 0.1 * jax.random.normal(k2, (16, 8, 3, 3), jnp.float32),
        "b2": jnp.zeros((16,), jnp.float32),
        "wg": 0.05 * jax.random.normal(k3, (16, 6), jnp.float32),
        "wx": 0.05 * jax.random.normal(k4, (6, 6), jnp.float32),
        "bh": jnp.zeros((6,), jnp.float32),
    }


def lccraft_forward(params, img, pcd, Tcl, camera_info, num_iters):
    """LCCRAFT.forward: pcd_tf = se3.transform(Tcl, pcd); encoder(img, pcd_tf).

    The transform + depth projection are one chunked Pallas kernel; the whole
    encoder (channel concat, two 3x3 convs, GAP, iterative head) is a second
    fused Pallas kernel — no HBM intermediates or im2col duplication."""
    # TODO(synk): VanillaLCCRAFT's correlation-volume / GRU internals are not
    # given in the reference; a compact CNN + iterative linear-update head
    # stands in for it (produces one x0 per RAFT iteration).
    H = int(camera_info["height"])
    W = int(camera_info["width"])
    B = img.shape[0]
    S = (H + 2) * (W + 2)

    depth_flat = lidar_depth_padded(Tcl, pcd, camera_info)        # (B, S, 1)
    imgp = jnp.transpose(img, (0, 2, 3, 1)).astype(jnp.float32)   # NCHW->NHWC
    imgp = jnp.pad(imgp, ((0, 0), (1, 1), (1, 1), (0, 0))).reshape(B, S, 3)

    out = encoder_forward(params, imgp, depth_flat, H, W, num_iters)
    return [out[:, i, :] for i in range(num_iters)]               # (B,6) each


def raft_denoiser_forward(params, x_t, x_cond, num_iters=NUM_ITERS):
    """RAFTDenoiser.forward."""
    img, pcd, Tcl, camera_info = x_cond
    se3_x_t = se3_exp(x_t)                                        # (B,4,4)
    Tcl_c = jnp.einsum("bij,bjk->bik", se3_x_t, Tcl)
    x0_list = lccraft_forward(params, img, pcd, Tcl_c, camera_info, num_iters)
    return [se3_log(jnp.einsum("bij,bjk->bik", se3_exp(x0), se3_x_t))
            for x0 in x0_list]


if __name__ == "__main__":
    key = jax.random.PRNGKey(0)
    kimg, kpcd, kz, kx, kparam = jax.random.split(key, 5)
    B, N, H, W = 2, 512, 16, 16

    img = jax.random.normal(kimg, (B, 3, H, W), jnp.float32)

    xy = jax.random.uniform(kpcd, (B, N, 2), jnp.float32, -1.5, 1.5)
    zz = jax.random.uniform(kz, (B, N, 1), jnp.float32, 2.0, 6.0)
    pcd = jnp.concatenate([xy, zz], axis=-1)                      # (B,N,3)

    theta = 0.05
    c, s = jnp.cos(theta), jnp.sin(theta)
    T = jnp.array([[c, -s, 0.0, 0.1],
                   [s,  c, 0.0, 0.2],
                   [0., 0., 1.0, 0.3],
                   [0., 0., 0.0, 1.0]], jnp.float32)
    Tcl = jnp.stack([T, jnp.eye(4, dtype=jnp.float32)], axis=0)   # (B,4,4)

    camera_info = {"fx": 8.0, "fy": 8.0, "cx": 8.0, "cy": 8.0,
                   "height": H, "width": W}

    x_t = 0.05 * jax.random.normal(kx, (B, 6), jnp.float32)       # noisy twist
    params = init_params(kparam)

    x0_list = raft_denoiser_forward(params, x_t, (img, pcd, Tcl, camera_info))
    x0_list = jax.block_until_ready(x0_list)

    assert len(x0_list) == NUM_ITERS
    assert all(x.shape == (B, 6) for x in x0_list)
    assert all(bool(jnp.all(jnp.isfinite(x))) for x in x0_list)
    print("KERNEL_OK")
</pallas_src>

<mosaic_0001>
module attributes {stable_mosaic.version = 11 : i64} {
  func.func @_depth_kernel(%arg0: i32, %arg1: i32, %arg2: memref<4xf32, #tpu.memory_space<smem>>, %arg3: memref<2x12xf32, #tpu.memory_space<smem>>, %arg4: memref<1x3x256xf32, #tpu.memory_space<vmem>>, %arg5: memref<1x324x1xf32, #tpu.memory_space<vmem>>, %arg6: memref<324x256xf32, #tpu.memory_space<vmem>>) attributes {dimension_semantics = [#tpu.dimension_semantics<parallel>, #tpu.dimension_semantics<arbitrary>], iteration_bounds = array<i64: 2, 2>, scalar_prefetch = 2 : i64, scratch_operands = 1 : i64, tpu.core_type = #tpu.core_type<tc>, window_params = [{transform_indices = @transform_0, window_bounds = array<i64: 1, 3, 256>}, {transform_indices = @transform_1, window_bounds = array<i64: 1, 324, 1>}]} {
    %c0_i32 = arith.constant 0 : i32
    %0 = arith.cmpi eq, %arg1, %c0_i32 : i32
    %1 = arith.extui %0 : i1 to i32
    %c0_i32_0 = arith.constant 0 : i32
    %2 = arith.cmpi ne, %1, %c0_i32_0 : i32
    scf.if %2 {
      %cst_25 = arith.constant 1.000000e+30 : f32
      %134 = vector.broadcast %cst_25 : f32 to vector<324x256xf32>
      %c0_26 = arith.constant 0 : index
      %c0_27 = arith.constant 0 : index
      %135 = vector.load %arg6[%c0_26, %c0_27] : memref<324x256xf32, #tpu.memory_space<vmem>>, vector<324x256xf32>
      tpu.vector_store %arg6[%c0_26, %c0_27], %134 {strides = array<i32>} : memref<324x256xf32, #tpu.memory_space<vmem>>, vector<324x256xf32>,
    } else {
    }
    %c0 = arith.constant 0 : index
    %c0_1 = arith.constant 0 : index
    %c0_2 = arith.constant 0 : index
    %3 = vector.load %arg4[%c0, %c0_1, %c0_2] : memref<1x3x256xf32, #tpu.memory_space<vmem>>, vector<1x3x256xf32>
    %4 = vector.shape_cast %3 : vector<1x3x256xf32> to vector<3x256xf32>
    %5 = vector.extract_strided_slice %4 {offsets = [0, 0], sizes = [1, 256], strides = [1, 1]} : vector<3x256xf32> to vector<1x256xf32>
    %6 = vector.extract_strided_slice %4 {offsets = [1, 0], sizes = [1, 256], strides = [1, 1]} : vector<3x256xf32> to vector<1x256xf32>
    %7 = vector.extract_strided_slice %4 {offsets = [2, 0], sizes = [1, 256], strides = [1, 1]} : vector<3x256xf32> to vector<1x256xf32>
    %8 = arith.index_cast %arg0 : i32 to index
    %c0_3 = arith.constant 0 : index
    %9 = memref.load %arg3[%8, %c0_3] : memref<2x12xf32, #tpu.memory_space<smem>>
    %10 = vector.broadcast %9 : f32 to vector<1x256xf32>
    %11 = arith.mulf %10, %5 : vector<1x256xf32>
    %12 = arith.index_cast %arg0 : i32 to index
    %c1 = arith.constant 1 : index
    %13 = memref.load %arg3[%12, %c1] : memref<2x12xf32, #tpu.memory_space<smem>>
    %14 = vector.broadcast %13 : f32 to vector<1x256xf32>
    %15 = arith.mulf %14, %6 : vector<1x256xf32>
    %16 = arith.addf %11, %15 : vector<1x256xf32>
    %17 = arith.index_cast %arg0 : i32 to index
    %c2 = arith.constant 2 : index
    %18 = memref.load %arg3[%17, %c2] : memref<2x12xf32, #tpu.memory_space<smem>>
    %19 = vector.broadcast %18 : f32 to vector<1x256xf32>
    %20 = arith.mulf %19, %7 : vector<1x256xf32>
    %21 = arith.addf %16, %20 : vector<1x256xf32>
    %22 = arith.index_cast %arg0 : i32 to index
    %c3 = arith.constant 3 : index
    %23 = memref.load %arg3[%22, %c3] : memref<2x12xf32, #tpu.memory_space<smem>>
    %24 = vector.broadcast %23 : f32 to vector<1x256xf32>
    %25 = arith.addf %21, %24 : vector<1x256xf32>
    %26 = arith.index_cast %arg0 : i32 to index
    %c4 = arith.constant 4 : index
    %27 = memref.load %arg3[%26, %c4] : memref<2x12xf32, #tpu.memory_space<smem>>
    %28 = vector.broadcast %27 : f32 to vector<1x256xf32>
    %29 = arith.mulf %28, %5 : vector<1x256xf32>
    %30 = arith.index_cast %arg0 : i32 to index
    %c5 = arith.constant 5 : index
    %31 = memref.load %arg3[%30, %c5] : memref<2x12xf32, #tpu.memory_space<smem>>
    %32 = vector.broadcast %31 : f32 to vector<1x256xf32>
    %33 = arith.mulf %32, %6 : vector<1x256xf32>
    %34 = arith.addf %29, %33 : vector<1x256xf32>
    %35 = arith.index_cast %arg0 : i32 to index
    %c6 = arith.constant 6 : index
    %36 = memref.load %arg3[%35, %c6] : memref<2x12xf32, #tpu.memory_space<smem>>
    %37 = vector.broadcast %36 : f32 to vector<1x256xf32>
    %38 = arith.mulf %37, %7 : vector<1x256xf32>
    %39 = arith.addf %34, %38 : vector<1x256xf32>
    %40 = arith.index_cast %arg0 : i32 to index
    %c7 = arith.constant 7 : index
    %41 = memref.load %arg3[%40, %c7] : memref<2x12xf32, #tpu.memory_space<smem>>
    %42 = vector.broadcast %41 : f32 to vector<1x256xf32>
    %43 = arith.addf %39, %42 : vector<1x256xf32>
    %44 = arith.index_cast %arg0 : i32 to index
    %c8 = arith.constant 8 : index
    %45 = memref.load %arg3[%44, %c8] : memref<2x12xf32, #tpu.memory_space<smem>>
    %46 = vector.broadcast %45 : f32 to vector<1x256xf32>
    %47 = arith.mulf %46, %5 : vector<1x256xf32>
    %48 = arith.index_cast %arg0 : i32 to index
    %c9 = arith.constant 9 : index
    %49 = memref.load %arg3[%48, %c9] : memref<2x12xf32, #tpu.memory_space<smem>>
    %50 = vector.broadcast %49 : f32 to vector<1x256xf32>
    %51 = arith.mulf %50, %6 : vector<1x256xf32>
    %52 = arith.addf %47, %51 : vector<1x256xf32>
    %53 = arith.index_cast %arg0 : i32 to index
    %c10 = arith.constant 10 : index
    %54 = memref.load %arg3[%53, %c10] : memref<2x12xf32, #tpu.memory_space<smem>>
    %55 = vector.broadcast %54 : f32 to vector<1x256xf32>
    %56 = arith.mulf %55, %7 : vector<1x256xf32>
    %57 = arith.addf %52, %56 : vector<1x256xf32>
    %58 = arith.index_cast %arg0 : i32 to index
    %c11 = arith.constant 11 : index
    %59 = memref.load %arg3[%58, %c11] : memref<2x12xf32, #tpu.memory_space<smem>>
    %60 = vector.broadcast %59 : f32 to vector<1x256xf32>
    %61 = arith.addf %57, %60 : vector<1x256xf32>
    %c0_4 = arith.constant 0 : index
    %62 = memref.load %arg2[%c0_4] : memref<4xf32, #tpu.memory_space<smem>>
    %c1_5 = arith.constant 1 : index
    %63 = memref.load %arg2[%c1_5] : memref<4xf32, #tpu.memory_space<smem>>
    %c2_6 = arith.constant 2 : index
    %64 = memref.load %arg2[%c2_6] : memref<4xf32, #tpu.memory_space<smem>>
    %c3_7 = arith.constant 3 : index
    %65 = memref.load %arg2[%c3_7] : memref<4xf32, #tpu.memory_space<smem>>
    %cst = arith.constant 9.99999997E-7 : f32
    %66 = vector.broadcast %cst : f32 to vector<1x256xf32>
    %67 = arith.cmpf ogt, %61, %66 : vector<1x256xf32>
    %cst_8 = arith.constant 1.000000e+00 : f32
    %68 = vector.broadcast %cst_8 : f32 to vector<1x256xf32>
    %69 = arith.select %67, %61, %68 : vector<1x256xi1>, vector<1x256xf32>
    %70 = vector.broadcast %62 : f32 to vector<1x256xf32>
    %71 = arith.mulf %70, %25 : vector<1x256xf32>
    %72 = arith.divf %71, %69 : vector<1x256xf32>
    %73 = vector.broadcast %64 : f32 to vector<1x256xf32>
    %74 = arith.addf %72, %73 : vector<1x256xf32>
    %75 = vector.broadcast %63 : f32 to vector<1x256xf32>
    %76 = arith.mulf %75, %43 : vector<1x256xf32>
    %77 = arith.divf %76, %69 : vector<1x256xf32>
    %78 = vector.broadcast %65 : f32 to vector<1x256xf32>
    %79 = arith.addf %77, %78 : vector<1x256xf32>
    %c256_i32 = arith.constant 256 : i32
    %80 = arith.muli %arg1, %c256_i32 : i32
    %81 = tpu.iota {dimensions = array<i32: 1>} : vector<1x256xi32>
    %82 = vector.broadcast %80 : i32 to vector<1x256xi32>
    %83 = arith.addi %82, %81 : vector<1x256xi32>
    %cst_9 = arith.constant 0.000000e+00 : f32
    %84 = vector.broadcast %cst_9 : f32 to vector<1x256xf32>
    %85 = arith.cmpf oge, %74, %84 : vector<1x256xf32>
    %86 = arith.andi %67, %85 : vector<1x256xi1>
    %cst_10 = arith.constant 1.600000e+01 : f32
    %87 = vector.broadcast %cst_10 : f32 to vector<1x256xf32>
    %88 = arith.cmpf olt, %74, %87 : vector<1x256xf32>
    %89 = arith.andi %86, %88 : vector<1x256xi1>
    %cst_11 = arith.constant 0.000000e+00 : f32
    %90 = vector.broadcast %cst_11 : f32 to vector<1x256xf32>
    %91 = arith.cmpf oge, %79, %90 : vector<1x256xf32>
    %92 = arith.andi %89, %91 : vector<1x256xi1>
    %cst_12 = arith.constant 1.600000e+01 : f32
    %93 = vector.broadcast %cst_12 : f32 to vector<1x256xf32>
    %94 = arith.cmpf olt, %79, %93 : vector<1x256xf32>
    %95 = arith.andi %92, %94 : vector<1x256xi1>
    %c512_i32 = arith.constant 512 : i32
    %96 = vector.broadcast %c512_i32 : i32 to vector<1x256xi32>
    %97 = arith.cmpi slt, %83, %96 : vector<1x256xi32>
    %98 = arith.andi %95, %97 : vector<1x256xi1>
    %99 = math.floor %74 : vector<1x256xf32>
    %cst_13 = arith.constant 0.000000e+00 : f32
    %cst_14 = arith.constant 1.500000e+01 : f32
    %100 = vector.broadcast %cst_13 : f32 to vector<1x256xf32>
    %101 = arith.maximumf %100, %99 : vector<1x256xf32>
    %102 = vector.broadcast %cst_14 : f32 to vector<1x256xf32>
    %103 = arith.minimumf %102, %101 : vector<1x256xf32>
    %104 = arith.fptosi %103 : vector<1x256xf32> to vector<1x256xi32>
    %105 = math.floor %79 : vector<1x256xf32>
    %cst_15 = arith.constant 0.000000e+00 : f32
    %cst_16 = arith.constant 1.500000e+01 : f32
    %106 = vector.broadcast %cst_15 : f32 to vector<1x256xf32>
    %107 = arith.maximumf %106, %105 : vector<1x256xf32>
    %108 = vector.broadcast %cst_16 : f32 to vector<1x256xf32>
    %109 = arith.minimumf %108, %107 : vector<1x256xf32>
    %110 = arith.fptosi %109 : vector<1x256xf32> to vector<1x256xi32>
    %c1_i32 = arith.constant 1 : i32
    %111 = vector.broadcast %c1_i32 : i32 to vector<1x256xi32>
    %112 = arith.addi %110, %111 : vector<1x256xi32>
    %c18_i32 = arith.constant 18 : i32
    %113 = vector.broadcast %c18_i32 : i32 to vector<1x256xi32>
    %114 = arith.muli %112, %113 : vector<1x256xi32>
    %c1_i32_17 = arith.constant 1 : i32
    %115 = vector.broadcast %c1_i32_17 : i32 to vector<1x256xi32>
    %116 = arith.addi %104, %115 : vector<1x256xi32>
    %117 = arith.addi %114, %116 : vector<1x256xi32>
    %118 = tpu.iota {dimensions = array<i32: 0>} : vector<324x1xi32>
    %119 = vector.broadcast %118 : vector<324x1xi32> to vector<324x256xi32>
    %120 = vector.broadcast %117 : vector<1x256xi32> to vector<324x256xi32>
    %121 = arith.cmpi eq, %119, %120 : vector<324x256xi32>
    %122 = vector.broadcast %98 : vector<1x256xi1> to vector<324x256xi1>
    %123 = arith.andi %121, %122 : vector<324x256xi1>
    %c0_18 = arith.constant 0 : index
    %c0_19 = arith.constant 0 : index
    %124 = vector.load %arg6[%c0_18, %c0_19] : memref<324x256xf32, #tpu.memory_space<vmem>>, vector<324x256xf32>
    %cst_20 = arith.constant 1.000000e+30 : f32
    %125 = vector.shape_cast %61 : vector<1x256xf32> to vector<1x256xf32>
    %126 = vector.broadcast %125 : vector<1x256xf32> to vector<324x256xf32>
    %127 = vector.broadcast %cst_20 : f32 to vector<324x256xf32>
    %128 = arith.select %123, %126, %127 : vector<324x256xi1>, vector<324x256xf32>
    %129 = arith.minimumf %124, %128 : vector<324x256xf32>
    %c0_21 = arith.constant 0 : index
    %c0_22 = arith.constant 0 : index
    %130 = vector.load %arg6[%c0_21, %c0_22] : memref<324x256xf32, #tpu.memory_space<vmem>>, vector<324x256xf32>
    tpu.vector_store %arg6[%c0_21, %c0_22], %129 {strides = array<i32>} : memref<324x256xf32, #tpu.memory_space<vmem>>, vector<324x256xf32>,
    %c1_i32_23 = arith.constant 1 : i32
    %131 = arith.cmpi eq, %arg1, %c1_i32_23 : i32
    %132 = arith.extui %131 : i1 to i32
    %c0_i32_24 = arith.constant 0 : i32
    %133 = arith.cmpi ne, %132, %c0_i32_24 : i32
    scf.if %133 {
      %c0_25 = arith.constant 0 : index
      %c0_26 = arith.constant 0 : index
      %134 = vector.load %arg6[%c0_25, %c0_26] : memref<324x256xf32, #tpu.memory_space<vmem>>, vector<324x256xf32>
      %cst_27 = arith.constant dense<0x7F800000> : vector<324xf32>
      %135 = vector.multi_reduction <minimumf>, %134, %cst_27 [1] : vector<324x256xf32> to vector<324xf32>
      %136 = vector.shape_cast %135 : vector<324xf32> to vector<324x1xf32>
      %cst_28 = arith.constant 5.000000e+29 : f32
      %137 = vector.broadcast %cst_28 : f32 to vector<324x1xf32>
      %138 = arith.cmpf oge, %136, %137 : vector<324x1xf32>
      %cst_29 = arith.constant 0.000000e+00 : f32
      %139 = vector.broadcast %cst_29 : f32 to vector<324x1xf32>
      %140 = arith.select %138, %139, %136 : vector<324x1xi1>, vector<324x1xf32>
      %c0_30 = arith.constant 0 : index
      %c0_31 = arith.constant 0 : index
      %c0_32 = arith.constant 0 : index
      %141 = vector.load %arg5[%c0_30, %c0_31, %c0_32] : memref<1x324x1xf32, #tpu.memory_space<vmem>>, vector<1x324x1xf32>
      %142 = vector.shape_cast %141 : vector<1x324x1xf32> to vector<324x1xf32>
      %143 = vector.shape_cast %140 : vector<324x1xf32> to vector<1x324x1xf32>
      tpu.vector_store %arg5[%c0_30, %c0_31, %c0_32], %143 {strides = array<i32>} : memref<1x324x1xf32, #tpu.memory_space<vmem>>, vector<1x324x1xf32>,
    } else {
    }
    return
  }
  func.func @transform_0(%arg0: i32, %arg1: i32, %arg2: memref<4xf32, #tpu.memory_space<smem>>, %arg3: memref<2x12xf32, #tpu.memory_space<smem>>) -> (i32, i32, i32) {
    %c0_i32 = arith.constant 0 : i32
    %c0_i32_0 = arith.constant 0 : i32
    return %arg0, %c0_i32, %arg1 : i32, i32, i32
  }
  func.func @transform_1(%arg0: i32, %arg1: i32, %arg2: memref<4xf32, #tpu.memory_space<smem>>, %arg3: memref<2x12xf32, #tpu.memory_space<smem>>) -> (i32, i32, i32) {
    %c0_i32 = arith.constant 0 : i32
    %c0_i32_0 = arith.constant 0 : i32
    %c0_i32_1 = arith.constant 0 : i32
    return %arg0, %c0_i32, %c0_i32_0 : i32, i32, i32
  }
}

</mosaic_0001>

<llo_original>
// kernel: tpu_custom_call.1
$region0: #{tpu_custom_call.1}
  #allocation0 [shape = 'u32[]', space=smem, size = 0x4, offset = 0x4, fixed_abs, tag = 'smem constant byte address 0x4 - core index']
  #allocation1 [shape = 'u32[144,128]{1,0:T(1,128)}', space=vmem, size = 0x12000, scoped, tag = 'internal scratch']
  #allocation2 [shape = 'f32[324,256]{1,0:T(8,128)}', space=vmem, size = 0x52000, scoped, tag = 'scratch operand']
  #allocation3 [shape = 's32[1]{0}', space=sflag, size = 0x4, scoped, tag = 'scoped memory for tpu_custom_call.1']
  #allocation4 [shape = 'u8[512]{0}', space=smem, size = 0x200, scoped, tag = 'prefetched SMEM operand 0']
  #allocation5 [shape = 'u8[1024]{0}', space=smem, size = 0x400, scoped, tag = 'prefetched SMEM operand 1']
  %s0 = inlined_call_operand.vmem [shape: f32[4], index: 0, kind: input, shape index: {}]
  %s1 = inlined_call_operand.vmem [shape: f32[2,12], index: 1, kind: input, shape index: {}]
  %s2 = inlined_call_operand.vmem [shape: f32[2,3,512], index: 2, kind: input, shape index: {}]
  %s3 = inlined_call_operand.vmem [shape: f32[2,324,1], index: 3, kind: output, shape index: {}]
  %s4 = sld [smem:[#allocation0]]
  $region45: #{tpu_custom_call.1} parent=0
    _
  %s6 = ssub.s32 1, %s4
  %s7 = scalar_select 0, %s6, %s4
  %s8 = sshll.u32 %s0, 4
  %s9 = int_to_ptr.vmem [resolvable:$true] %s8
  %11 = dma.vmem_to_smem %s9, 16, [#allocation4], [#allocation3]
  %s12 = sshll.u32 %s1, 4
  %s13 = int_to_ptr.vmem [resolvable:$true] %s12
  %15 = dma.vmem_to_smem %s13, 32, [#allocation5], [#allocation3]
  %16 = dma.done [#allocation3], 48
  %17 = sfence
  loop: start=0, step=1, limit=6
  $region2: #{tpu_custom_call.1} parent=0 // loop_pre_header
    _
  $region3: #{tpu_custom_call.1} parent=0 // loop_header
    %s19 = sphi 0, %s23
    %p20 = scmp.ge.s32.totalorder %s19, 6
    %s26 = sphi 0, %s38
    %s27 = sphi 0, %s34
    %s28 = sphi 0, %s26
    %s29 = sphi 0, %s27
    %s30 = sphi 0, %s28
    %s31 = sphi 0, %s29
    %s43 = sphi 0, %s45
    %s46 = sphi 0, %s43
    %s47 = sphi 0, %s46
    %s63 = sphi 0, %s47
    %s69 = sphi 0, %s71
    %s72 = sphi 0, %s69
    %s73 = sphi 0, %s72
    %s89 = sphi 0, %s73
  $region4: #{tpu_custom_call.1} parent=0 // loop_header_branch
    %22 = sbr.rel (%p20) target = $region8
  $region5: #{tpu_custom_call.1} parent=0 // loop_body
    %s24 = ssub.s32 %s19, 1
    %s25 = ssub.s32 %s19, 2
    %s32 = sadd.s32 1, %s27
    %p33 = scmp.ge.s32.totalorder %s32, 2
    %s34 = scalar_select %p33, 0, %s32
    %s35 = sadd.s32 1, %s26
    %s36 = scalar_select %p33, %s35, %s26
    %p37 = scmp.ge.s32.totalorder %s36, 2
    %s38 = scalar_select %p37, 0, %s36
    %s39 = ssub.s32 %s26, %s38
    %s40 = ssub.s32 %s27, %s34
    %s41 = sor.u32 %s39, %s40
    %p42 = scmp.eq.s32.totalorder %s41, 0
    %s44 = sadd.s32 %s43, 1
    %s45 = scalar_select %p42, %s43, %s44
    %p48 = pneg %p42
    %p49 = scmp.eq.s32.totalorder %s19, 3
    %p50 = por %p48, %p49
    %p51 = scmp.ne.s32.totalorder %s43, %s46
    %p52 = scmp.eq.s32.totalorder %s19, 0
    %p53 = por %p51, %p52
    %p54 = scmp.ne.s32.totalorder %s43, %s46
    %p55 = scmp.eq.s32.totalorder %s24, 3
    %p56 = por %p54, %p55
    %p57 = scmp.ne.s32.totalorder %s46, %s47
    %p58 = scmp.eq.s32.totalorder %s24, 0
    %p59 = por %p57, %p58
    %p60 = scmp.ne.s32.totalorder %s46, %s47
    %p61 = scmp.eq.s32.totalorder %s25, 3
    %p62 = por %p60, %p61
    %p64 = scmp.ne.s32.totalorder %s47, %s63
    %p65 = scmp.eq.s32.totalorder %s25, 0
    %p66 = por %p64, %p65
    %s67 = ssub.s32 %s26, %s38
    %p68 = scmp.eq.s32.totalorder %s67, 0
    %s70 = sadd.s32 %s69, 1
    %s71 = scalar_select %p68, %s69, %s70
    %p74 = pneg %p68
    %p75 = scmp.eq.s32.totalorder %s19, 3
    %p76 = por %p74, %p75
    %p77 = scmp.ne.s32.totalorder %s69, %s72
    %p78 = scmp.eq.s32.totalorder %s19, 0
    %p79 = por %p77, %p78
    %p80 = scmp.ne.s32.totalorder %s69, %s72
    %p81 = scmp.eq.s32.totalorder %s24, 3
    %p82 = por %p80, %p81
    %p83 = scmp.ne.s32.totalorder %s72, %s73
    %p84 = scmp.eq.s32.totalorder %s24, 0
    %p85 = por %p83, %p84
    %p86 = scmp.ne.s32.totalorder %s72, %s73
    %p87 = scmp.eq.s32.totalorder %s25, 3
    %p88 = por %p86, %p87
    %p90 = scmp.ne.s32.totalorder %s73, %s89
    %p91 = scmp.eq.s32.totalorder %s25, 0
    %p92 = por %p90, %p91
    %p93 = scmp.le.s32.totalorder 1, %s19
    %p94 = scmp.lt.s32.totalorder %s19, 5
    %p95 = pnand %p93, %p94
    %p96 = pneg %p95
    // Predicated region
    $region9: #{tpu_custom_call.1} parent=5 // pred_check
      _
    $region10: #{tpu_custom_call.1} parent=5 // pred_check_branch
      %98 = sbr.rel (%p95) target = $region12
    $region11: #{tpu_custom_call.1} parent=5 // pred_region
      %s99 = ssub.s32 %s19, 1
    $region12: #{tpu_custom_call.1} parent=5 // pred_fallthru
      _
    %p100 = scmp.lt.s32.totalorder %s19, 4
    // Predicated region
    $region13: #{tpu_custom_call.1} parent=5 // pred_check
      %p101 = pneg %p100
    $region14: #{tpu_custom_call.1} parent=5 // pred_check_branch
      %103 = sbr.rel (%p101) target = $region16
    $region15: #{tpu_custom_call.1} parent=5 // pred_region
      // Predicated region
      $region17: #{tpu_custom_call.1} parent=15 // pred_check
        %p104 = pneg %p53
      $region18: #{tpu_custom_call.1} parent=15 // pred_check_branch
        %106 = sbr.rel (%p104) target = $region20
      $region19: #{tpu_custom_call.1} parent=15 // pred_region
        %s107 = smul.u32 2, %s27
        %p108 = scmp.lt.s32.totalorder %s26, 1
        %s109 = scalar_select %p108, %s26, 1
        %p110 = scmp.lt.s32.totalorder %s107, 3
        %s111 = scalar_select %p110, %s107, 3
        %s112 = smul.addr %s109, 4
        %s113 = sadd.s32 %s111, %s112
        %s114 = smul.addr %s113, 4
        %s115 = scalar_lea.vmem %s2, %s114
        %s116 = smul.u32 2, %s27
      $region20: #{tpu_custom_call.1} parent=15 // pred_fallthru
        _
    $region16: #{tpu_custom_call.1} parent=5 // pred_fallthru
      _
    %p117 = scmp.le.s32.totalorder 1, %s19
    %p118 = scmp.lt.s32.totalorder %s19, 5
    %p119 = pnand %p117, %p118
    %p120 = pneg %p119
    // Predicated region
    $region21: #{tpu_custom_call.1} parent=5 // pred_check
      _
    $region22: #{tpu_custom_call.1} parent=5 // pred_check_branch
      %122 = sbr.rel (%p119) target = $region24
    $region23: #{tpu_custom_call.1} parent=5 // pred_region
      %s123 = ssub.s32 %s19, 1
      %s124 = smul.u32 2, %s29
      %p125 = scmp.lt.s32.totalorder %s28, 1
      %s126 = scalar_select %p125, %s28, 1
      %p127 = scmp.lt.s32.totalorder %s124, 3
      %s128 = scalar_select %p127, %s124, 3
      %s129 = smul.addr %s126, 4
      %s130 = sadd.s32 %s128, %s129
      %s131 = smul.addr %s130, 4
      %s132 = scalar_lea.vmem %s2, %s131
      %p133 = pneg %p59
      %p134 = pneg %p56
      %p135 = pneg %p85
      %p136 = pneg %p82
      %p137 = scmp.lt.s32.totalorder %s28, 1
      %s138 = scalar_select %p137, %s28, 1
      %s139 = smul.addr %s138, 41
      %s140 = smul.addr %s139, 8
      %s141 = scalar_lea.vmem %s3, %s140
      %s142 = smul.u32 2, %s29
      %p143 = scmp.lt.s32.totalorder %s28, 1
      %s144 = scalar_select %p143, %s28, 1
      %p145 = scmp.lt.s32.totalorder %s142, 3
      %s146 = scalar_select %p145, %s142, 3
      %s147 = smul.addr %s144, 4
      %s148 = sadd.s32 %s146, %s147
      %s149 = smul.addr %s148, 4
      %s150 = scalar_lea.vmem %s2, %s149
      %s151 = smul.u32 2, %s29
      %p152 = scmp.lt.s32.totalorder %s28, 1
      %s153 = scalar_select %p152, %s28, 1
      %s154 = smul.addr %s153, 41
      %s155 = smul.addr %s154, 8
      %s156 = scalar_lea.vmem %s3, %s155
      %p157 = scmp.eq.s32.totalorder %s29, 0
      // Predicated region
      $region25: #{tpu_custom_call.1} parent=23 // pred_check
        %p158 = pneg %p157
      $region26: #{tpu_custom_call.1} parent=23 // pred_check_branch
        %160 = sbr.rel (%p158) target = $region28
      $region27: #{tpu_custom_call.1} parent=23 // pred_region
        %161 = vst [vmem:[#allocation2] sm:$0xff] 1e+30
        %162 = vst [vmem:[#allocation2 + $0x8] sm:$0xff] 1e+30
        %163 = vst [vmem:[#allocation2 + $0x10] sm:$0xff] 1e+30
        %164 = vst [vmem:[#allocation2 + $0x18] sm:$0xff] 1e+30
        %165 = vst [vmem:[#allocation2 + $0x20] sm:$0xff] 1e+30
        %166 = vst [vmem:[#allocation2 + $0x28] sm:$0xff] 1e+30
        %167 = vst [vmem:[#allocation2 + $0x30] sm:$0xff] 1e+30
        %168 = vst [vmem:[#allocation2 + $0x38] sm:$0xff] 1e+30
        %169 = vst [vmem:[#allocation2 + $0x40] sm:$0xff] 1e+30
        %170 = vst [vmem:[#allocation2 + $0x48] sm:$0xff] 1e+30
        %171 = vst [vmem:[#allocation2 + $0x50] sm:$0xff] 1e+30
        %172 = vst [vmem:[#allocation2 + $0x58] sm:$0xff] 1e+30
        %173 = vst [vmem:[#allocation2 + $0x60] sm:$0xff] 1e+30
        %174 = vst [vmem:[#allocation2 + $0x68] sm:$0xff] 1e+30
        %175 = vst [vmem:[#allocation2 + $0x70] sm:$0xff] 1e+30
        %176 = vst [vmem:[#allocation2 + $0x78] sm:$0xff] 1e+30
        %177 = vst [vmem:[#allocation2 + $0x80] sm:$0xff] 1e+30
        %178 = vst [vmem:[#allocation2 + $0x88] sm:$0xff] 1e+30
        %179 = vst [vmem:[#allocation2 + $0x90] sm:$0xff] 1e+30
        %180 = vst [vmem:[#allocation2 + $0x98] sm:$0xff] 1e+30
        %181 = vst [vmem:[#allocation2 + $0xa0] sm:$0xff] 1e+30
        %182 = vst [vmem:[#allocation2 + $0xa8] sm:$0xff] 1e+30
        %183 = vst [vmem:[#allocation2 + $0xb0] sm:$0xff] 1e+30
        %184 = vst [vmem:[#allocation2 + $0xb8] sm:$0xff] 1e+30
        %185 = vst [vmem:[#allocation2 + $0xc0] sm:$0xff] 1e+30
        %186 = vst [vmem:[#allocation2 + $0xc8] sm:$0xff] 1e+30
        %187 = vst [vmem:[#allocation2 + $0xd0] sm:$0xff] 1e+30
        %188 = vst [vmem:[#allocation2 + $0xd8] sm:$0xff] 1e+30
        %189 = vst [vmem:[#allocation2 + $0xe0] sm:$0xff] 1e+30
        %190 = vst [vmem:[#allocation2 + $0xe8] sm:$0xff] 1e+30
        %191 = vst [vmem:[#allocation2 + $0xf0] sm:$0xff] 1e+30
        %192 = vst [vmem:[#allocation2 + $0xf8] sm:$0xff] 1e+30
        %193 = vst [vmem:[#allocation2 + $0x100] sm:$0xff] 1e+30
        %194 = vst [vmem:[#allocation2 + $0x108] sm:$0xff] 1e+30
        %195 = vst [vmem:[#allocation2 + $0x110] sm:$0xff] 1e+30
        %196 = vst [vmem:[#allocation2 + $0x118] sm:$0xff] 1e+30
        %197 = vst [vmem:[#allocation2 + $0x120] sm:$0xff] 1e+30
        %198 = vst [vmem:[#allocation2 + $0x128] sm:$0xff] 1e+30
        %199 = vst [vmem:[#allocation2 + $0x130] sm:$0xff] 1e+30
        %200 = vst [vmem:[#allocation2 + $0x138] sm:$0xff] 1e+30
        %201 = vst [vmem:[#allocation2 + $0x140] sm:$0xff] 1e+30
        %202 = vst [vmem:[#allocation2 + $0x148] sm:$0xff] 1e+30
        %203 = vst [vmem:[#allocation2 + $0x150] sm:$0xff] 1e+30
        %204 = vst [vmem:[#allocation2 + $0x158] sm:$0xff] 1e+30
        %205 = vst [vmem:[#allocation2 + $0x160] sm:$0xff] 1e+30
        %206 = vst [vmem:[#allocation2 + $0x168] sm:$0xff] 1e+30
        %207 = vst [vmem:[#allocation2 + $0x170] sm:$0xff] 1e+30
        %208 = vst [vmem:[#allocation2 + $0x178] sm:$0xff] 1e+30
        %209 = vst [vmem:[#allocation2 + $0x180] sm:$0xff] 1e+30
        %210 = vst [vmem:[#allocation2 + $0x188] sm:$0xff] 1e+30
        %211 = vst [vmem:[#allocation2 + $0x190] sm:$0xff] 1e+30
        %212 = vst [vmem:[#allocation2 + $0x198] sm:$0xff] 1e+30
        %213 = vst [vmem:[#allocation2 + $0x1a0] sm:$0xff] 1e+30
        %214 = vst [vmem:[#allocation2 + $0x1a8] sm:$0xff] 1e+30
        %215 = vst [vmem:[#allocation2 + $0x1b0] sm:$0xff] 1e+30
        %216 = vst [vmem:[#allocation2 + $0x1b8] sm:$0xff] 1e+30
        %217 = vst [vmem:[#allocation2 + $0x1c0] sm:$0xff] 1e+30
        %218 = vst [vmem:[#allocation2 + $0x1c8] sm:$0xff] 1e+30
        %219 = vst [vmem:[#allocation2 + $0x1d0] sm:$0xff] 1e+30
        %220 = vst [vmem:[#allocation2 + $0x1d8] sm:$0xff] 1e+30
        %221 = vst [vmem:[#allocation2 + $0x1e0] sm:$0xff] 1e+30
        %222 = vst [vmem:[#allocation2 + $0x1e8] sm:$0xff] 1e+30
        %223 = vst [vmem:[#allocation2 + $0x1f0] sm:$0xff] 1e+30
        %224 = vst [vmem:[#allocation2 + $0x1f8] sm:$0xff] 1e+30
        %225 = vst [vmem:[#allocation2 + $0x200] sm:$0xff] 1e+30
        %226 = vst [vmem:[#allocation2 + $0x208] sm:$0xff] 1e+30
        %227 = vst [vmem:[#allocation2 + $0x210] sm:$0xff] 1e+30
        %228 = vst [vmem:[#allocation2 + $0x218] sm:$0xff] 1e+30
        %229 = vst [vmem:[#allocation2 + $0x220] sm:$0xff] 1e+30
        %230 = vst [vmem:[#allocation2 + $0x228] sm:$0xff] 1e+30
        %231 = vst [vmem:[#allocation2 + $0x230] sm:$0xff] 1e+30
        %232 = vst [vmem:[#allocation2 + $0x238] sm:$0xff] 1e+30
        %233 = vst [vmem:[#allocation2 + $0x240] sm:$0xff] 1e+30
        %234 = vst [vmem:[#allocation2 + $0x248] sm:$0xff] 1e+30
        %235 = vst [vmem:[#allocation2 + $0x250] sm:$0xff] 1e+30
        %236 = vst [vmem:[#allocation2 + $0x258] sm:$0xff] 1e+30
        %237 = vst [vmem:[#allocation2 + $0x260] sm:$0xff] 1e+30
        %238 = vst [vmem:[#allocation2 + $0x268] sm:$0xff] 1e+30
        %239 = vst [vmem:[#allocation2 + $0x270] sm:$0xff] 1e+30
        %240 = vst [vmem:[#allocation2 + $0x278] sm:$0xff] 1e+30
        %241 = vst [vmem:[#allocation2 + $0x280] sm:$0xf] 1e+30
        %242 = vst [vmem:[#allocation2 + $0x288] sm:$0xf] 1e+30
      $region28: #{tpu_custom_call.1} parent=23 // pred_fallthru
        _
      %v243 = vld [vmem:[%s150] sm:$0x77]
      %s244 = smul.u32 %s28, 128
      %s245 = sld [smem:[#allocation5 + %s244]]
      %v246 = vstv %s245
      %v247 = vmul.f32 %v246, %v243
      %s248 = sadd.s32 %s244, 1
      %s249 = sld [smem:[#allocation5 + %s248]]
      %v250 = vstv %s249
      %v251 = vmul.f32 %v250, %v243
      %v253 = vrot.slane %v251, 5
      %v254 = vrot.slane %v253, 4
      %v256 = vadd.f32 %v247, %v254
      %s257 = sadd.s32 %s244, 2
      %s258 = sld [smem:[#allocation5 + %s257]]
      %v259 = vstv %s258
      %v260 = vmul.f32 %v259, %v243
      %v262 = vrot.slane %v260, 6
      %v263 = vrot.slane %v262, 4
      %v265 = vadd.f32 %v256, %v263
      %s266 = sadd.s32 %s244, 3
      %s267 = sld [smem:[#allocation5 + %s266]]
      %v268 = vstv %s267
      %v269 = vadd.f32 %v265, %v268
      %s270 = sadd.s32 %s244, 4
      %s271 = sld [smem:[#allocation5 + %s270]]
      %v272 = vstv %s271
      %v273 = vmul.f32 %v272, %v243
      %s274 = sadd.s32 %s244, 5
      %s275 = sld [smem:[#allocation5 + %s274]]
      %v276 = vstv %s275
      %v277 = vmul.f32 %v276, %v243
      %v279 = vrot.slane %v277, 5
      %v280 = vrot.slane %v279, 4
      %v282 = vadd.f32 %v273, %v280
      %s283 = sadd.s32 %s244, 6
      %s284 = sld [smem:[#allocation5 + %s283]]
      %v285 = vstv %s284
      %v286 = vmul.f32 %v285, %v243
      %v288 = vrot.slane %v286, 6
      %v289 = vrot.slane %v288, 4
      %v291 = vadd.f32 %v282, %v289
      %s292 = sadd.s32 %s244, 7
      %s293 = sld [smem:[#allocation5 + %s292]]
      %v294 = vstv %s293
      %v295 = vadd.f32 %v291, %v294
      %s296 = sadd.s32 %s244, 8
      %s297 = sld [smem:[#allocation5 + %s296]]
      %v298 = vstv %s297
      %v299 = vmul.f32 %v298, %v243
      %s300 = sadd.s32 %s244, 9
      %s301 = sld [smem:[#allocation5 + %s300]]
      %v302 = vstv %s301
      %v303 = vmul.f32 %v302, %v243
      %v305 = vrot.slane %v303, 5
      %v306 = vrot.slane %v305, 4
      %v308 = vadd.f32 %v299, %v306
      %s309 = sadd.s32 %s244, 10
      %s310 = sld [smem:[#allocation5 + %s309]]
      %v311 = vstv %s310
      %v312 = vmul.f32 %v311, %v243
      %v314 = vrot.slane %v312, 6
      %v315 = vrot.slane %v314, 4
      %v317 = vadd.f32 %v308, %v315
      %s318 = sadd.s32 %s244, 11
      %s319 = sld [smem:[#allocation5 + %s318]]
      %v320 = vstv %s319
      %v321 = vadd.f32 %v317, %v320
      %s322 = sld [smem:[#allocation4]]
      %s323 = sld [smem:[#allocation4 + $0x1]]
      %s324 = sld [smem:[#allocation4 + $0x2]]
      %s325 = sld [smem:[#allocation4 + $0x3]]
      %vm326 = vcmp.gt.f32.partialorder %v321, 1e-06
      %v327 = vsel %vm326, %v321, 1.0
      %v328 = vstv %s322
      %v329 = vmul.f32 %v328, %v269
      %v330 = vrcp.pop %v327
      %v331 = vmul.f32 %v329, %v330
      %v332 = vstv %s324
      %v333 = vadd.f32 %v331, %v332
      %v334 = vstv %s323
      %v335 = vmul.f32 %v334, %v295
      %v336 = vmul.f32 %v335, %v330
      %v337 = vstv %s325
      %v338 = vadd.f32 %v336, %v337
      %s339 = smul.u32 %s29, 256
      %v340 = vlaneseq
      %v341 = vand.u32 %v340, 127
      %v342 = vadd.s32 %v341, 128
      %v343 = vstv %s339
      %v344 = vadd.s32 %v343, %v341
      %v345 = vadd.s32 %v343, %v342
      %vm346 = vcmp.ge.f32.partialorder %v333, 0.0
      %vm347 = vmand %vm326, %vm346
      %vm348 = vcmp.lt.f32.partialorder %v333, 16.0
      %vm349 = vmand %vm347, %vm348
      %vm350 = vcmp.ge.f32.partialorder %v338, 0.0
      %vm351 = vmand %vm349, %vm350
      %vm352 = vcmp.lt.f32.partialorder %v338, 16.0
      %vm353 = vmand %vm351, %vm352
      %vm354 = vcmp.lt.s32.totalorder %v344, 512
      %vm355 = vcmp.lt.s32.totalorder %v345, 512
      %v356 = vsel %vm354, 1, 0
      %v357 = vsel %vm355, 1, 0
      %v358 = vcombine.low %v356, %v357
      %vm359 = vcmp.ne.s32.totalorder %v358, 0
      %vm360 = vmand %vm353, %vm359
      %v361 = vfloor.f32 %v333
      %v362 = vmax.f32 %v361, 0.0
      %v363 = vmin.f32 %v362, 15.0
      %v364 = vcvt.f32.s32.to.zero.pseudo %v363
      %v365 = vfloor.f32 %v338
      %v366 = vmax.f32 %v365, 0.0
      %v367 = vmin.f32 %v366, 15.0
      %v368 = vcvt.f32.s32.to.zero.pseudo %v367
      %v369 = vadd.s32 %v368, 1
      %v370 = vmul.u32 %v369, 18
      %v371 = vadd.s32 %v364, 1
      %v372 = vadd.s32 %v370, %v371
      %v373 = vlaneseq
      %v374 = vshrl.u32 %v373, 7
      %v375 = vadd.s32 %v374, 8
      %v376 = vadd.s32 %v374, 16
      %v377 = vadd.s32 %v374, 24
      %v378 = vadd.s32 %v374, 32
      %v379 = vadd.s32 %v374, 40
      %v380 = vadd.s32 %v374, 48
      %v381 = vadd.s32 %v374, 56
      %v382 = vadd.s32 %v374, 64
      %v383 = vadd.s32 %v374, 72
      %v384 = vadd.s32 %v374, 80
      %v385 = vadd.s32 %v374, 88
      %v386 = vadd.s32 %v374, 96
      %v387 = vadd.s32 %v374, 104
      %v388 = vadd.s32 %v374, 112
      %v389 = vadd.s32 %v374, 120
      %v390 = vadd.s32 %v374, 128
      %v391 = vadd.s32 %v374, 136
      %v392 = vadd.s32 %v374, 144
      %v393 = vadd.s32 %v374, 152
      %v394 = vadd.s32 %v374, 160
      %v395 = vadd.s32 %v374, 168
      %v396 = vadd.s32 %v374, 176
      %v397 = vadd.s32 %v374, 184
      %v398 = vadd.s32 %v374, 192
      %v399 = vadd.s32 %v374, 200
      %v400 = vadd.s32 %v374, 208
      %v401 = vadd.s32 %v374, 216
      %v402 = vadd.s32 %v374, 224
      %v403 = vadd.s32 %v374, 232
      %v404 = vadd.s32 %v374, 240
      %v405 = vadd.s32 %v374, 248
      %v406 = vadd.s32 %v374, 256
      %v407 = vadd.s32 %v374, 264
      %v408 = vadd.s32 %v374, 272
      %v409 = vadd.s32 %v374, 280
      %v410 = vadd.s32 %v374, 288
      %v411 = vadd.s32 %v374, 296
      %v412 = vadd.s32 %v374, 304
      %v413 = vadd.s32 %v374, 312
      %v414 = vadd.s32 %v374, 320
      %v415 = vlaneseq
      %v416 = vshrl.u32 %v415, 7
      %v417 = vsub.s32 0, %v416
      %v418 = vrot.slane %v372, %v417
      %v419 = vlaneseq
      %v420 = vshrl.u32 %v419, 7
      %v421 = vsub.s32 4, %v420
      %v422 = vrot.slane %v372, %v421
      %v423 = vlaneseq
      %v424 = vshrl.u32 %v423, 7
      %v425 = vsub.s32 0, %v424
      %v426 = vrot.slane %v418, %v425
      %v427 = vlaneseq
      %v428 = vshrl.u32 %v427, 7
      %v429 = vsub.s32 0, %v428
      %v430 = vrot.slane %v422, %v429
      %vm431 = vcmp.eq.s32.totalorder %v374, %v426
      %vm432 = vcmp.eq.s32.totalorder %v374, %v430
      %vm433 = vcmp.eq.s32.totalorder %v375, %v426
      %vm434 = vcmp.eq.s32.totalorder %v375, %v430
      %vm435 = vcmp.eq.s32.totalorder %v376, %v426
      %vm436 = vcmp.eq.s32.totalorder %v376, %v430
      %vm437 = vcmp.eq.s32.totalorder %v377, %v426
      %vm438 = vcmp.eq.s32.totalorder %v377, %v430
      %vm439 = vcmp.eq.s32.totalorder %v378, %v426
      %vm440 = vcmp.eq.s32.totalorder %v378, %v430
      %vm441 = vcmp.eq.s32.totalorder %v379, %v426
      %vm442 = vcmp.eq.s32.totalorder %v379, %v430
      %vm443 = vcmp.eq.s32.totalorder %v380, %v426
      %vm444 = vcmp.eq.s32.totalorder %v380, %v430
      %vm445 = vcmp.eq.s32.totalorder %v381, %v426
      %vm446 = vcmp.eq.s32.totalorder %v381, %v430
      %vm447 = vcmp.eq.s32.totalorder %v382, %v426
      %vm448 = vcmp.eq.s32.totalorder %v382, %v430
      %vm449 = vcmp.eq.s32.totalorder %v383, %v426
      %vm450 = vcmp.eq.s32.totalorder %v383, %v430
      %vm451 = vcmp.eq.s32.totalorder %v384, %v426
      %vm452 = vcmp.eq.s32.totalorder %v384, %v430
      %vm453 = vcmp.eq.s32.totalorder %v385, %v426
      %vm454 = vcmp.eq.s32.totalorder %v385, %v430
      %vm455 = vcmp.eq.s32.totalorder %v386, %v426
      %vm456 = vcmp.eq.s32.totalorder %v386, %v430
      %vm457 = vcmp.eq.s32.totalorder %v387, %v426
      %vm458 = vcmp.eq.s32.totalorder %v387, %v430
      %vm459 = vcmp.eq.s32.totalorder %v388, %v426
      %vm460 = vcmp.eq.s32.totalorder %v388, %v430
      %vm461 = vcmp.eq.s32.totalorder %v389, %v426
      %vm462 = vcmp.eq.s32.totalorder %v389, %v430
      %vm463 = vcmp.eq.s32.totalorder %v390, %v426
      %vm464 = vcmp.eq.s32.totalorder %v390, %v430
      %vm465 = vcmp.eq.s32.totalorder %v391, %v426
      %vm466 = vcmp.eq.s32.totalorder %v391, %v430
      %vm467 = vcmp.eq.s32.totalorder %v392, %v426
      %vm468 = vcmp.eq.s32.totalorder %v392, %v430
      %vm469 = vcmp.eq.s32.totalorder %v393, %v426
      %vm470 = vcmp.eq.s32.totalorder %v393, %v430
      %vm471 = vcmp.eq.s32.totalorder %v394, %v426
      %vm472 = vcmp.eq.s32.totalorder %v394, %v430
      %vm473 = vcmp.eq.s32.totalorder %v395, %v426
      %vm474 = vcmp.eq.s32.totalorder %v395, %v430
      %vm475 = vcmp.eq.s32.totalorder %v396, %v426
      %vm476 = vcmp.eq.s32.totalorder %v396, %v430
      %vm477 = vcmp.eq.s32.totalorder %v397, %v426
      %vm478 = vcmp.eq.s32.totalorder %v397, %v430
      %vm479 = vcmp.eq.s32.totalorder %v398, %v426
      %vm480 = vcmp.eq.s32.totalorder %v398, %v430
      %vm481 = vcmp.eq.s32.totalorder %v399, %v426
      %vm482 = vcmp.eq.s32.totalorder %v399, %v430
      %vm483 = vcmp.eq.s32.totalorder %v400, %v426
      %vm484 = vcmp.eq.s32.totalorder %v400, %v430
      %vm485 = vcmp.eq.s32.totalorder %v401, %v426
      %vm486 = vcmp.eq.s32.totalorder %v401, %v430
      %vm487 = vcmp.eq.s32.totalorder %v402, %v426
      %vm488 = vcmp.eq.s32.totalorder %v402, %v430
      %vm489 = vcmp.eq.s32.totalorder %v403, %v426
      %vm490 = vcmp.eq.s32.totalorder %v403, %v430
      %vm491 = vcmp.eq.s32.totalorder %v404, %v426
      %vm492 = vcmp.eq.s32.totalorder %v404, %v430
      %vm493 = vcmp.eq.s32.totalorder %v405, %v426
      %vm494 = vcmp.eq.s32.totalorder %v405, %v430
      %vm495 = vcmp.eq.s32.totalorder %v406, %v426
      %vm496 = vcmp.eq.s32.totalorder %v406, %v430
      %vm497 = vcmp.eq.s32.totalorder %v407, %v426
      %vm498 = vcmp.eq.s32.totalorder %v407, %v430
      %vm499 = vcmp.eq.s32.totalorder %v408, %v426
      %vm500 = vcmp.eq.s32.totalorder %v408, %v430
      %vm501 = vcmp.eq.s32.totalorder %v409, %v426
      %vm502 = vcmp.eq.s32.totalorder %v409, %v430
      %vm503 = vcmp.eq.s32.totalorder %v410, %v426
      %vm504 = vcmp.eq.s32.totalorder %v410, %v430
      %vm505 = vcmp.eq.s32.totalorder %v411, %v426
      %vm506 = vcmp.eq.s32.totalorder %v411, %v430
      %vm507 = vcmp.eq.s32.totalorder %v412, %v426
      %vm508 = vcmp.eq.s32.totalorder %v412, %v430
      %vm509 = vcmp.eq.s32.totalorder %v413, %v426
      %vm510 = vcmp.eq.s32.totalorder %v413, %v430
      %vm511 = vcmp.eq.s32.totalorder %v414, %v426
      %vm512 = vcmp.eq.s32.totalorder %v414, %v430
      %v513 = vsel %vm360, 1, 0
      %v514 = vlaneseq
      %v515 = vshrl.u32 %v514, 7
      %v516 = vsub.s32 0, %v515
      %v517 = vrot.slane %v513, %v516
      %v518 = vlaneseq
      %v519 = vshrl.u32 %v518, 7
      %v520 = vsub.s32 4, %v519
      %v521 = vrot.slane %v513, %v520
      %v522 = vlaneseq
      %v523 = vshrl.u32 %v522, 7
      %v524 = vsub.s32 0, %v523
      %v525 = vrot.slane %v517, %v524
      %v526 = vlaneseq
      %v527 = vshrl.u32 %v526, 7
      %v528 = vsub.s32 0, %v527
      %v529 = vrot.slane %v521, %v528
      %vm530 = vcmp.eq.s32.totalorder %v525, 1
      %vm531 = vcmp.eq.s32.totalorder %v529, 1
      %vm532 = vmand %vm431, %vm530
      %vm533 = vmand %vm432, %vm531
      %vm534 = vmand %vm433, %vm530
      %vm535 = vmand %vm434, %vm531
      %vm536 = vmand %vm435, %vm530
      %vm537 = vmand %vm436, %vm531
      %vm538 = vmand %vm437, %vm530
      %vm539 = vmand %vm438, %vm531
      %vm540 = vmand %vm439, %vm530
      %vm541 = vmand %vm440, %vm531
      %vm542 = vmand %vm441, %vm530
      %vm543 = vmand %vm442, %vm531
      %vm544 = vmand %vm443, %vm530
      %vm545 = vmand %vm444, %vm531
      %vm546 = vmand %vm445, %vm530
      %vm547 = vmand %vm446, %vm531
      %vm548 = vmand %vm447, %vm530
      %vm549 = vmand %vm448, %vm531
      %vm550 = vmand %vm449, %vm530
      %vm551 = vmand %vm450, %vm531
      %vm552 = vmand %vm451, %vm530
      %vm553 = vmand %vm452, %vm531
      %vm554 = vmand %vm453, %vm530
      %vm555 = vmand %vm454, %vm531
      %vm556 = vmand %vm455, %vm530
      %vm557 = vmand %vm456, %vm531
      %vm558 = vmand %vm457, %vm530
      %vm559 = vmand %vm458, %vm531
      %vm560 = vmand %vm459, %vm530
      %vm561 = vmand %vm460, %vm531
      %vm562 = vmand %vm461, %vm530
      %vm563 = vmand %vm462, %vm531
      %vm564 = vmand %vm463, %vm530
      %vm565 = vmand %vm464, %vm531
      %vm566 = vmand %vm465, %vm530
      %vm567 = vmand %vm466, %vm531
      %vm568 = vmand %vm467, %vm530
      %vm569 = vmand %vm468, %vm531
      %vm570 = vmand %vm469, %vm530
      %vm571 = vmand %vm470, %vm531
      %vm572 = vmand %vm471, %vm530
      %vm573 = vmand %vm472, %vm531
      %vm574 = vmand %vm473, %vm530
      %vm575 = vmand %vm474, %vm531
      %vm576 = vmand %vm475, %vm530
      %vm577 = vmand %vm476, %vm531
      %vm578 = vmand %vm477, %vm530
      %vm579 = vmand %vm478, %vm531
      %vm580 = vmand %vm479, %vm530
      %vm581 = vmand %vm480, %vm531
      %vm582 = vmand %vm481, %vm530
      %vm583 = vmand %vm482, %vm531
      %vm584 = vmand %vm483, %vm530
      %vm585 = vmand %vm484, %vm531
      %vm586 = vmand %vm485, %vm530
      %vm587 = vmand %vm486, %vm531
      %vm588 = vmand %vm487, %vm530
      %vm589 = vmand %vm488, %vm531
      %vm590 = vmand %vm489, %vm530
      %vm591 = vmand %vm490, %vm531
      %vm592 = vmand %vm491, %vm530
      %vm593 = vmand %vm492, %vm531
      %vm594 = vmand %vm493, %vm530
      %vm595 = vmand %vm494, %vm531
      %vm596 = vmand %vm495, %vm530
      %vm597 = vmand %vm496, %vm531
      %vm598 = vmand %vm497, %vm530
      %vm599 = vmand %vm498, %vm531
      %vm600 = vmand %vm499, %vm530
      %vm601 = vmand %vm500, %vm531
      %vm602 = vmand %vm501, %vm530
      %vm603 = vmand %vm502, %vm531
      %vm604 = vmand %vm503, %vm530
      %vm605 = vmand %vm504, %vm531
      %vm606 = vmand %vm505, %vm530
      %vm607 = vmand %vm506, %vm531
      %vm608 = vmand %vm507, %vm530
      %vm609 = vmand %vm508, %vm531
      %vm610 = vmand %vm509, %vm530
      %vm611 = vmand %vm510, %vm531
      %vm612 = vmand %vm511, %vm530
      %vm613 = vmand %vm512, %vm531
      %v614 = vld [vmem:[#allocation2] sm:$0xff]
      %v615 = vld [vmem:[#allocation2 + $0x8] sm:$0xff]
      %v616 = vld [vmem:[#allocation2 + $0x10] sm:$0xff]
      %v617 = vld [vmem:[#allocation2 + $0x18] sm:$0xff]
      %v618 = vld [vmem:[#allocation2 + $0x20] sm:$0xff]
      %v619 = vld [vmem:[#allocation2 + $0x28] sm:$0xff]
      %v620 = vld [vmem:[#allocation2 + $0x30] sm:$0xff]
      %v621 = vld [vmem:[#allocation2 + $0x38] sm:$0xff]
      %v622 = vld [vmem:[#allocation2 + $0x40] sm:$0xff]
      %v623 = vld [vmem:[#allocation2 + $0x48] sm:$0xff]
      %v624 = vld [vmem:[#allocation2 + $0x50] sm:$0xff]
      %v625 = vld [vmem:[#allocation2 + $0x58] sm:$0xff]
      %v626 = vld [vmem:[#allocation2 + $0x60] sm:$0xff]
      %v627 = vld [vmem:[#allocation2 + $0x68] sm:$0xff]
      %v628 = vld [vmem:[#allocation2 + $0x70] sm:$0xff]
      %v629 = vld [vmem:[#allocation2 + $0x78] sm:$0xff]
      %v630 = vld [vmem:[#allocation2 + $0x80] sm:$0xff]
      %v631 = vld [vmem:[#allocation2 + $0x88] sm:$0xff]
      %v632 = vld [vmem:[#allocation2 + $0x90] sm:$0xff]
      %v633 = vld [vmem:[#allocation2 + $0x98] sm:$0xff]
      %v634 = vld [vmem:[#allocation2 + $0xa0] sm:$0xff]
      %v635 = vld [vmem:[#allocation2 + $0xa8] sm:$0xff]
      %v636 = vld [vmem:[#allocation2 + $0xb0] sm:$0xff]
      %v637 = vld [vmem:[#allocation2 + $0xb8] sm:$0xff]
      %v638 = vld [vmem:[#allocation2 + $0xc0] sm:$0xff]
      %v639 = vld [vmem:[#allocation2 + $0xc8] sm:$0xff]
      %v640 = vld [vmem:[#allocation2 + $0xd0] sm:$0xff]
      %v641 = vld [vmem:[#allocation2 + $0xd8] sm:$0xff]
      %v642 = vld [vmem:[#allocation2 + $0xe0] sm:$0xff]
      %v643 = vld [vmem:[#allocation2 + $0xe8] sm:$0xff]
      %v644 = vld [vmem:[#allocation2 + $0xf0] sm:$0xff]
      %v645 = vld [vmem:[#allocation2 + $0xf8] sm:$0xff]
      %v646 = vld [vmem:[#allocation2 + $0x100] sm:$0xff]
      %v647 = vld [vmem:[#allocation2 + $0x108] sm:$0xff]
      %v648 = vld [vmem:[#allocation2 + $0x110] sm:$0xff]
      %v649 = vld [vmem:[#allocation2 + $0x118] sm:$0xff]
      %v650 = vld [vmem:[#allocation2 + $0x120] sm:$0xff]
      %v651 = vld [vmem:[#allocation2 + $0x128] sm:$0xff]
      %v652 = vld [vmem:[#allocation2 + $0x130] sm:$0xff]
      %v653 = vld [vmem:[#allocation2 + $0x138] sm:$0xff]
      %v654 = vld [vmem:[#allocation2 + $0x140] sm:$0xff]
      %v655 = vld [vmem:[#allocation2 + $0x148] sm:$0xff]
      %v656 = vld [vmem:[#allocation2 + $0x150] sm:$0xff]
      %v657 = vld [vmem:[#allocation2 + $0x158] sm:$0xff]
      %v658 = vld [vmem:[#allocation2 + $0x160] sm:$0xff]
      %v659 = vld [vmem:[#allocation2 + $0x168] sm:$0xff]
      %v660 = vld [vmem:[#allocation2 + $0x170] sm:$0xff]
      %v661 = vld [vmem:[#allocation2 + $0x178] sm:$0xff]
      %v662 = vld [vmem:[#allocation2 + $0x180] sm:$0xff]
      %v663 = vld [vmem:[#allocation2 + $0x188] sm:$0xff]
      %v664 = vld [vmem:[#allocation2 + $0x190] sm:$0xff]
      %v665 = vld [vmem:[#allocation2 + $0x198] sm:$0xff]
      %v666 = vld [vmem:[#allocation2 + $0x1a0] sm:$0xff]
      %v667 = vld [vmem:[#allocation2 + $0x1a8] sm:$0xff]
      %v668 = vld [vmem:[#allocation2 + $0x1b0] sm:$0xff]
      %v669 = vld [vmem:[#allocation2 + $0x1b8] sm:$0xff]
      %v670 = vld [vmem:[#allocation2 + $0x1c0] sm:$0xff]
      %v671 = vld [vmem:[#allocation2 + $0x1c8] sm:$0xff]
      %v672 = vld [vmem:[#allocation2 + $0x1d0] sm:$0xff]
      %v673 = vld [vmem:[#allocation2 + $0x1d8] sm:$0xff]
      %v674 = vld [vmem:[#allocation2 + $0x1e0] sm:$0xff]
      %v675 = vld [vmem:[#allocation2 + $0x1e8] sm:$0xff]
      %v676 = vld [vmem:[#allocation2 + $0x1f0] sm:$0xff]
      %v677 = vld [vmem:[#allocation2 + $0x1f8] sm:$0xff]
      %v678 = vld [vmem:[#allocation2 + $0x200] sm:$0xff]
      %v679 = vld [vmem:[#allocation2 + $0x208] sm:$0xff]
      %v680 = vld [vmem:[#allocation2 + $0x210] sm:$0xff]
      %v681 = vld [vmem:[#allocation2 + $0x218] sm:$0xff]
      %v682 = vld [vmem:[#allocation2 + $0x220] sm:$0xff]
      %v683 = vld [vmem:[#allocation2 + $0x228] sm:$0xff]
      %v684 = vld [vmem:[#allocation2 + $0x230] sm:$0xff]
      %v685 = vld [vmem:[#allocation2 + $0x238] sm:$0xff]
      %v686 = vld [vmem:[#allocation2 + $0x240] sm:$0xff]
      %v687 = vld [vmem:[#allocation2 + $0x248] sm:$0xff]
      %v688 = vld [vmem:[#allocation2 + $0x250] sm:$0xff]
      %v689 = vld [vmem:[#allocation2 + $0x258] sm:$0xff]
      %v690 = vld [vmem:[#allocation2 + $0x260] sm:$0xff]
      %v691 = vld [vmem:[#allocation2 + $0x268] sm:$0xff]
      %v692 = vld [vmem:[#allocation2 + $0x270] sm:$0xff]
      %v693 = vld [vmem:[#allocation2 + $0x278] sm:$0xff]
      %v694 = vld [vmem:[#allocation2 + $0x280] sm:$0xf]
      %v695 = vld [vmem:[#allocation2 + $0x288] sm:$0xf]
      %v697 = vlaneseq
      %v698 = vshrl.u32 %v697, 7
      %v699 = vsub.s32 0, %v698
      %v700 = vrot.slane %v321, %v699
      %v701 = vlaneseq
      %v702 = vshrl.u32 %v701, 7
      %v703 = vsub.s32 4, %v702
      %v704 = vrot.slane %v321, %v703
      %v707 = vlaneseq
      %v708 = vshrl.u32 %v707, 7
      %v709 = vsub.s32 0, %v708
      %v710 = vrot.slane %v700, %v709
      %v711 = vlaneseq
      %v712 = vshrl.u32 %v711, 7
      %v713 = vsub.s32 0, %v712
      %v714 = vrot.slane %v704, %v713
      %v715 = vsel %vm532, %v710, 1e+30
      %v716 = vsel %vm533, %v714, 1e+30
      %v717 = vsel %vm534, %v710, 1e+30
      %v718 = vsel %vm535, %v714, 1e+30
      %v719 = vsel %vm536, %v710, 1e+30
      %v720 = vsel %vm537, %v714, 1e+30
      %v721 = vsel %vm538, %v710, 1e+30
      %v722 = vsel %vm539, %v714, 1e+30
      %v723 = vsel %vm540, %v710, 1e+30
      %v724 = vsel %vm541, %v714, 1e+30
      %v725 = vsel %vm542, %v710, 1e+30
      %v726 = vsel %vm543, %v714, 1e+30
      %v727 = vsel %vm544, %v710, 1e+30
      %v728 = vsel %vm545, %v714, 1e+30
      %v729 = vsel %vm546, %v710, 1e+30
      %v730 = vsel %vm547, %v714, 1e+30
      %v731 = vsel %vm548, %v710, 1e+30
      %v732 = vsel %vm549, %v714, 1e+30
      %v733 = vsel %vm550, %v710, 1e+30
      %v734 = vsel %vm551, %v714, 1e+30
      %v735 = vsel %vm552, %v710, 1e+30
      %v736 = vsel %vm553, %v714, 1e+30
      %v737 = vsel %vm554, %v710, 1e+30
      %v738 = vsel %vm555, %v714, 1e+30
      %v739 = vsel %vm556, %v710, 1e+30
      %v740 = vsel %vm557, %v714, 1e+30
      %v741 = vsel %vm558, %v710, 1e+30
      %v742 = vsel %vm559, %v714, 1e+30
      %v743 = vsel %vm560, %v710, 1e+30
      %v744 = vsel %vm561, %v714, 1e+30
      %v745 = vsel %vm562, %v710, 1e+30
      %v746 = vsel %vm563, %v714, 1e+30
      %v747 = vsel %vm564, %v710, 1e+30
      %v748 = vsel %vm565, %v714, 1e+30
      %v749 = vsel %vm566, %v710, 1e+30
      %v750 = vsel %vm567, %v714, 1e+30
      %v751 = vsel %vm568, %v710, 1e+30
      %v752 = vsel %vm569, %v714, 1e+30
      %v753 = vsel %vm570, %v710, 1e+30
      %v754 = vsel %vm571, %v714, 1e+30
      %v755 = vsel %vm572, %v710, 1e+30
      %v756 = vsel %vm573, %v714, 1e+30
      %v757 = vsel %vm574, %v710, 1e+30
      %v758 = vsel %vm575, %v714, 1e+30
      %v759 = vsel %vm576, %v710, 1e+30
      %v760 = vsel %vm577, %v714, 1e+30
      %v761 = vsel %vm578, %v710, 1e+30
      %v762 = vsel %vm579, %v714, 1e+30
      %v763 = vsel %vm580, %v710, 1e+30
      %v764 = vsel %vm581, %v714, 1e+30
      %v765 = vsel %vm582, %v710, 1e+30
      %v766 = vsel %vm583, %v714, 1e+30
      %v767 = vsel %vm584, %v710, 1e+30
      %v768 = vsel %vm585, %v714, 1e+30
      %v769 = vsel %vm586, %v710, 1e+30
      %v770 = vsel %vm587, %v714, 1e+30
      %v771 = vsel %vm588, %v710, 1e+30
      %v772 = vsel %vm589, %v714, 1e+30
      %v773 = vsel %vm590, %v710, 1e+30
      %v774 = vsel %vm591, %v714, 1e+30
      %v775 = vsel %vm592, %v710, 1e+30
      %v776 = vsel %vm593, %v714, 1e+30
      %v777 = vsel %vm594, %v710, 1e+30
      %v778 = vsel %vm595, %v714, 1e+30
      %v779 = vsel %vm596, %v710, 1e+30
      %v780 = vsel %vm597, %v714, 1e+30
      %v781 = vsel %vm598, %v710, 1e+30
      %v782 = vsel %vm599, %v714, 1e+30
      %v783 = vsel %vm600, %v710, 1e+30
      %v784 = vsel %vm601, %v714, 1e+30
      %v785 = vsel %vm602, %v710, 1e+30
      %v786 = vsel %vm603, %v714, 1e+30
      %v787 = vsel %vm604, %v710, 1e+30
      %v788 = vsel %vm605, %v714, 1e+30
      %v789 = vsel %vm606, %v710, 1e+30
      %v790 = vsel %vm607, %v714, 1e+30
      %v791 = vsel %vm608, %v710, 1e+30
      %v792 = vsel %vm609, %v714, 1e+30
      %v793 = vsel %vm610, %v710, 1e+30
      %v794 = vsel %vm611, %v714, 1e+30
      %v795 = vsel %vm612, %v710, 1e+30
      %v796 = vsel %vm613, %v714, 1e+30
      %v797 = vmin.f32 %v614, %v715
      %v798 = vmin.f32 %v615, %v716
      %v799 = vmin.f32 %v616, %v717
      %v800 = vmin.f32 %v617, %v718
      %v801 = vmin.f32 %v618, %v719
      %v802 = vmin.f32 %v619, %v720
      %v803 = vmin.f32 %v620, %v721
      %v804 = vmin.f32 %v621, %v722
      %v805 = vmin.f32 %v622, %v723
      %v806 = vmin.f32 %v623, %v724
      %v807 = vmin.f32 %v624, %v725
      %v808 = vmin.f32 %v625, %v726
      %v809 = vmin.f32 %v626, %v727
      %v810 = vmin.f32 %v627, %v728
      %v811 = vmin.f32 %v628, %v729
      %v812 = vmin.f32 %v629, %v730
      %v813 = vmin.f32 %v630, %v731
      %v814 = vmin.f32 %v631, %v732
      %v815 = vmin.f32 %v632, %v733
      %v816 = vmin.f32 %v633, %v734
      %v817 = vmin.f32 %v634, %v735
      %v818 = vmin.f32 %v635, %v736
      %v819 = vmin.f32 %v636, %v737
      %v820 = vmin.f32 %v637, %v738
      %v821 = vmin.f32 %v638, %v739
      %v822 = vmin.f32 %v639, %v740
      %v823 = vmin.f32 %v640, %v741
      %v824 = vmin.f32 %v641, %v742
      %v825 = vmin.f32 %v642, %v743
      %v826 = vmin.f32 %v643, %v744
      %v827 = vmin.f32 %v644, %v745
      %v828 = vmin.f32 %v645, %v746
      %v829 = vmin.f32 %v646, %v747
      %v830 = vmin.f32 %v647, %v748
      %v831 = vmin.f32 %v648, %v749
      %v832 = vmin.f32 %v649, %v750
      %v833 = vmin.f32 %v650, %v751
      %v834 = vmin.f32 %v651, %v752
      %v835 = vmin.f32 %v652, %v753
      %v836 = vmin.f32 %v653, %v754
      %v837 = vmin.f32 %v654, %v755
      %v838 = vmin.f32 %v655, %v756
      %v839 = vmin.f32 %v656, %v757
      %v840 = vmin.f32 %v657, %v758
      %v841 = vmin.f32 %v658, %v759
      %v842 = vmin.f32 %v659, %v760
      %v843 = vmin.f32 %v660, %v761
      %v844 = vmin.f32 %v661, %v762
      %v845 = vmin.f32 %v662, %v763
      %v846 = vmin.f32 %v663, %v764
      %v847 = vmin.f32 %v664, %v765
      %v848 = vmin.f32 %v665, %v766
      %v849 = vmin.f32 %v666, %v767
      %v850 = vmin.f32 %v667, %v768
      %v851 = vmin.f32 %v668, %v769
      %v852 = vmin.f32 %v669, %v770
      %v853 = vmin.f32 %v670, %v771
      %v854 = vmin.f32 %v671, %v772
      %v855 = vmin.f32 %v672, %v773
      %v856 = vmin.f32 %v673, %v774
      %v857 = vmin.f32 %v674, %v775
      %v858 = vmin.f32 %v675, %v776
      %v859 = vmin.f32 %v676, %v777
      %v860 = vmin.f32 %v677, %v778
      %v861 = vmin.f32 %v678, %v779
      %v862 = vmin.f32 %v679, %v780
      %v863 = vmin.f32 %v680, %v781
      %v864 = vmin.f32 %v681, %v782
      %v865 = vmin.f32 %v682, %v783
      %v866 = vmin.f32 %v683, %v784
      %v867 = vmin.f32 %v684, %v785
      %v868 = vmin.f32 %v685, %v786
      %v869 = vmin.f32 %v686, %v787
      %v870 = vmin.f32 %v687, %v788
      %v871 = vmin.f32 %v688, %v789
      %v872 = vmin.f32 %v689, %v790
      %v873 = vmin.f32 %v690, %v791
      %v874 = vmin.f32 %v691, %v792
      %v875 = vmin.f32 %v692, %v793
      %v876 = vmin.f32 %v693, %v794
      %v877 = vmin.f32 %v694, %v795
      %v878 = vmin.f32 %v695, %v796
      %879 = vst [vmem:[#allocation2] sm:$0xff] %v797
      %880 = vst [vmem:[#allocation2 + $0x8] sm:$0xff] %v798
      %881 = vst [vmem:[#allocation2 + $0x10] sm:$0xff] %v799
      %882 = vst [vmem:[#allocation2 + $0x18] sm:$0xff] %v800
      %883 = vst [vmem:[#allocation2 + $0x20] sm:$0xff] %v801
      %884 = vst [vmem:[#allocation2 + $0x28] sm:$0xff] %v802
      %885 = vst [vmem:[#allocation2 + $0x30] sm:$0xff] %v803
      %886 = vst [vmem:[#allocation2 + $0x38] sm:$0xff] %v804
      %887 = vst [vmem:[#allocation2 + $0x40] sm:$0xff] %v805
      %888 = vst [vmem:[#allocation2 + $0x48] sm:$0xff] %v806
      %889 = vst [vmem:[#allocation2 + $0x50] sm:$0xff] %v807
      %890 = vst [vmem:[#allocation2 + $0x58] sm:$0xff] %v808
      %891 = vst [vmem:[#allocation2 + $0x60] sm:$0xff] %v809
      %892 = vst [vmem:[#allocation2 + $0x68] sm:$0xff] %v810
      %893 = vst [vmem:[#allocation2 + $0x70] sm:$0xff] %v811
      %894 = vst [vmem:[#allocation2 + $0x78] sm:$0xff] %v812
      %895 = vst [vmem:[#allocation2 + $0x80] sm:$0xff] %v813
      %896 = vst [vmem:[#allocation2 + $0x88] sm:$0xff] %v814
      %897 = vst [vmem:[#allocation2 + $0x90] sm:$0xff] %v815
      %898 = vst [vmem:[#allocation2 + $0x98] sm:$0xff] %v816
      %899 = vst [vmem:[#allocation2 + $0xa0] sm:$0xff] %v817
      %900 = vst [vmem:[#allocation2 + $0xa8] sm:$0xff] %v818
      %901 = vst [vmem:[#allocation2 + $0xb0] sm:$0xff] %v819
      %902 = vst [vmem:[#allocation2 + $0xb8] sm:$0xff] %v820
      %903 = vst [vmem:[#allocation2 + $0xc0] sm:$0xff] %v821
      %904 = vst [vmem:[#allocation2 + $0xc8] sm:$0xff] %v822
      %905 = vst [vmem:[#allocation2 + $0xd0] sm:$0xff] %v823
      %906 = vst [vmem:[#allocation2 + $0xd8] sm:$0xff] %v824
      %907 = vst [vmem:[#allocation2 + $0xe0] sm:$0xff] %v825
      %908 = vst [vmem:[#allocation2 + $0xe8] sm:$0xff] %v826
      %909 = vst [vmem:[#allocation2 + $0xf0] sm:$0xff] %v827
      %910 = vst [vmem:[#allocation2 + $0xf8] sm:$0xff] %v828
      %911 = vst [vmem:[#allocation2 + $0x100] sm:$0xff] %v829
      %912 = vst [vmem:[#allocation2 + $0x108] sm:$0xff] %v830
      %913 = vst [vmem:[#allocation2 + $0x110] sm:$0xff] %v831
      %914 = vst [vmem:[#allocation2 + $0x118] sm:$0xff] %v832
      %915 = vst [vmem:[#allocation2 + $0x120] sm:$0xff] %v833
      %916 = vst [vmem:[#allocation2 + $0x128] sm:$0xff] %v834
      %917 = vst [vmem:[#allocation2 + $0x130] sm:$0xff] %v835
      %918 = vst [vmem:[#allocation2 + $0x138] sm:$0xff] %v836
      %919 = vst [vmem:[#allocation2 + $0x140] sm:$0xff] %v837
      %920 = vst [vmem:[#allocation2 + $0x148] sm:$0xff] %v838
      %921 = vst [vmem:[#allocation2 + $0x150] sm:$0xff] %v839
      %922 = vst [vmem:[#allocation2 + $0x158] sm:$0xff] %v840
      %923 = vst [vmem:[#allocation2 + $0x160] sm:$0xff] %v841
      %924 = vst [vmem:[#allocation2 + $0x168] sm:$0xff] %v842
      %925 = vst [vmem:[#allocation2 + $0x170] sm:$0xff] %v843
      %926 = vst [vmem:[#allocation2 + $0x178] sm:$0xff] %v844
      %927 = vst [vmem:[#allocation2 + $0x180] sm:$0xff] %v845
      %928 = vst [vmem:[#allocation2 + $0x188] sm:$0xff] %v846
      %929 = vst [vmem:[#allocation2 + $0x190] sm:$0xff] %v847
      %930 = vst [vmem:[#allocation2 + $0x198] sm:$0xff] %v848
      %931 = vst [vmem:[#allocation2 + $0x1a0] sm:$0xff] %v849
      %932 = vst [vmem:[#allocation2 + $0x1a8] sm:$0xff] %v850
      %933 = vst [vmem:[#allocation2 + $0x1b0] sm:$0xff] %v851
      %934 = vst [vmem:[#allocation2 + $0x1b8] sm:$0xff] %v852
      %935 = vst [vmem:[#allocation2 + $0x1c0] sm:$0xff] %v853
      %936 = vst [vmem:[#allocation2 + $0x1c8] sm:$0xff] %v854
      %937 = vst [vmem:[#allocation2 + $0x1d0] sm:$0xff] %v855
      %938 = vst [vmem:[#allocation2 + $0x1d8] sm:$0xff] %v856
      %939 = vst [vmem:[#allocation2 + $0x1e0] sm:$0xff] %v857
      %940 = vst [vmem:[#allocation2 + $0x1e8] sm:$0xff] %v858
      %941 = vst [vmem:[#allocation2 + $0x1f0] sm:$0xff] %v859
      %942 = vst [vmem:[#allocation2 + $0x1f8] sm:$0xff] %v860
      %943 = vst [vmem:[#allocation2 + $0x200] sm:$0xff] %v861
      %944 = vst [vmem:[#allocation2 + $0x208] sm:$0xff] %v862
      %945 = vst [vmem:[#allocation2 + $0x210] sm:$0xff] %v863
      %946 = vst [vmem:[#allocation2 + $0x218] sm:$0xff] %v864
      %947 = vst [vmem:[#allocation2 + $0x220] sm:$0xff] %v865
      %948 = vst [vmem:[#allocation2 + $0x228] sm:$0xff] %v866
      %949 = vst [vmem:[#allocation2 + $0x230] sm:$0xff] %v867
      %950 = vst [vmem:[#allocation2 + $0x238] sm:$0xff] %v868
      %951 = vst [vmem:[#allocation2 + $0x240] sm:$0xff] %v869
      %952 = vst [vmem:[#allocation2 + $0x248] sm:$0xff] %v870
      %953 = vst [vmem:[#allocation2 + $0x250] sm:$0xff] %v871
      %954 = vst [vmem:[#allocation2 + $0x258] sm:$0xff] %v872
      %955 = vst [vmem:[#allocation2 + $0x260] sm:$0xff] %v873
      %956 = vst [vmem:[#allocation2 + $0x268] sm:$0xff] %v874
      %957 = vst [vmem:[#allocation2 + $0x270] sm:$0xff] %v875
      %958 = vst [vmem:[#allocation2 + $0x278] sm:$0xff] %v876
      %959 = vst [vmem:[#allocation2 + $0x280] sm:$0xf] %v877
      %960 = vst [vmem:[#allocation2 + $0x288] sm:$0xf] %v878
      %p961 = scmp.eq.s32.totalorder %s29, 1
      // Predicated region
      $region29: #{tpu_custom_call.1} parent=23 // pred_check
        %p962 = pneg %p961
      $region30: #{tpu_custom_call.1} parent=23 // pred_check_branch
        %964 = sbr.rel (%p962) target = $region32
      $region31: #{tpu_custom_call.1} parent=23 // pred_region
        %v965 = vld [vmem:[#allocation2] sm:$0xff]
        %v966 = vld [vmem:[#allocation2 + $0x8] sm:$0xff]
        %v967 = vld [vmem:[#allocation2 + $0x10] sm:$0xff]
        %v968 = vld [vmem:[#allocation2 + $0x18] sm:$0xff]
        %v969 = vld [vmem:[#allocation2 + $0x20] sm:$0xff]
        %v970 = vld [vmem:[#allocation2 + $0x28] sm:$0xff]
        %v971 = vld [vmem:[#allocation2 + $0x30] sm:$0xff]
        %v972 = vld [vmem:[#allocation2 + $0x38] sm:$0xff]
        %v973 = vld [vmem:[#allocation2 + $0x40] sm:$0xff]
        %v974 = vld [vmem:[#allocation2 + $0x48] sm:$0xff]
        %v975 = vld [vmem:[#allocation2 + $0x50] sm:$0xff]
        %v976 = vld [vmem:[#allocation2 + $0x58] sm:$0xff]
        %v977 = vld [vmem:[#allocation2 + $0x60] sm:$0xff]
        %v978 = vld [vmem:[#allocation2 + $0x68] sm:$0xff]
        %v979 = vld [vmem:[#allocation2 + $0x70] sm:$0xff]
        %v980 = vld [vmem:[#allocation2 + $0x78] sm:$0xff]
        %v981 = vld [vmem:[#allocation2 + $0x80] sm:$0xff]
        %v982 = vld [vmem:[#allocation2 + $0x88] sm:$0xff]
        %v983 = vld [vmem:[#allocation2 + $0x90] sm:$0xff]
        %v984 = vld [vmem:[#allocation2 + $0x98] sm:$0xff]
        %v985 = vld [vmem:[#allocation2 + $0xa0] sm:$0xff]
        %v986 = vld [vmem:[#allocation2 + $0xa8] sm:$0xff]
        %v987 = vld [vmem:[#allocation2 + $0xb0] sm:$0xff]
        %v988 = vld [vmem:[#allocation2 + $0xb8] sm:$0xff]
        %v989 = vld [vmem:[#allocation2 + $0xc0] sm:$0xff]
        %v990 = vld [vmem:[#allocation2 + $0xc8] sm:$0xff]
        %v991 = vld [vmem:[#allocation2 + $0xd0] sm:$0xff]
        %v992 = vld [vmem:[#allocation2 + $0xd8] sm:$0xff]
        %v993 = vld [vmem:[#allocation2 + $0xe0] sm:$0xff]
        %v994 = vld [vmem:[#allocation2 + $0xe8] sm:$0xff]
        %v995 = vld [vmem:[#allocation2 + $0xf0] sm:$0xff]
        %v996 = vld [vmem:[#allocation2 + $0xf8] sm:$0xff]
        %v997 = vld [vmem:[#allocation2 + $0x100] sm:$0xff]
        %v998 = vld [vmem:[#allocation2 + $0x108] sm:$0xff]
        %v999 = vld [vmem:[#allocation2 + $0x110] sm:$0xff]
        %v1000 = vld [vmem:[#allocation2 + $0x118] sm:$0xff]
        %v1001 = vld [vmem:[#allocation2 + $0x120] sm:$0xff]
        %v1002 = vld [vmem:[#allocation2 + $0x128] sm:$0xff]
        %v1003 = vld [vmem:[#allocation2 + $0x130] sm:$0xff]
        %v1004 = vld [vmem:[#allocation2 + $0x138] sm:$0xff]
        %v1005 = vld [vmem:[#allocation2 + $0x140] sm:$0xff]
        %v1006 = vld [vmem:[#allocation2 + $0x148] sm:$0xff]
        %v1007 = vld [vmem:[#allocation2 + $0x150] sm:$0xff]
        %v1008 = vld [vmem:[#allocation2 + $0x158] sm:$0xff]
        %v1009 = vld [vmem:[#allocation2 + $0x160] sm:$0xff]
        %v1010 = vld [vmem:[#allocation2 + $0x168] sm:$0xff]
        %v1011 = vld [vmem:[#allocation2 + $0x170] sm:$0xff]
        %v1012 = vld [vmem:[#allocation2 + $0x178] sm:$0xff]
        %v1013 = vld [vmem:[#allocation2 + $0x180] sm:$0xff]
        %v1014 = vld [vmem:[#allocation2 + $0x188] sm:$0xff]
        %v1015 = vld [vmem:[#allocation2 + $0x190] sm:$0xff]
        %v1016 = vld [vmem:[#allocation2 + $0x198] sm:$0xff]
        %v1017 = vld [vmem:[#allocation2 + $0x1a0] sm:$0xff]
        %v1018 = vld [vmem:[#allocation2 + $0x1a8] sm:$0xff]
        %v1019 = vld [vmem:[#allocation2 + $0x1b0] sm:$0xff]
        %v1020 = vld [vmem:[#allocation2 + $0x1b8] sm:$0xff]
        %v1021 = vld [vmem:[#allocation2 + $0x1c0] sm:$0xff]
        %v1022 = vld [vmem:[#allocation2 + $0x1c8] sm:$0xff]
        %v1023 = vld [vmem:[#allocation2 + $0x1d0] sm:$0xff]
        %v1024 = vld [vmem:[#allocation2 + $0x1d8] sm:$0xff]
        %v1025 = vld [vmem:[#allocation2 + $0x1e0] sm:$0xff]
        %v1026 = vld [vmem:[#allocation2 + $0x1e8] sm:$0xff]
        %v1027 = vld [vmem:[#allocation2 + $0x1f0] sm:$0xff]
        %v1028 = vld [vmem:[#allocation2 + $0x1f8] sm:$0xff]
        %v1029 = vld [vmem:[#allocation2 + $0x200] sm:$0xff]
        %v1030 = vld [vmem:[#allocation2 + $0x208] sm:$0xff]
        %v1031 = vld [vmem:[#allocation2 + $0x210] sm:$0xff]
        %v1032 = vld [vmem:[#allocation2 + $0x218] sm:$0xff]
        %v1033 = vld [vmem:[#allocation2 + $0x220] sm:$0xff]
        %v1034 = vld [vmem:[#allocation2 + $0x228] sm:$0xff]
        %v1035 = vld [vmem:[#allocation2 + $0x230] sm:$0xff]
        %v1036 = vld [vmem:[#allocation2 + $0x238] sm:$0xff]
        %v1037 = vld [vmem:[#allocation2 + $0x240] sm:$0xff]
        %v1038 = vld [vmem:[#allocation2 + $0x248] sm:$0xff]
        %v1039 = vld [vmem:[#allocation2 + $0x250] sm:$0xff]
        %v1040 = vld [vmem:[#allocation2 + $0x258] sm:$0xff]
        %v1041 = vld [vmem:[#allocation2 + $0x260] sm:$0xff]
        %v1042 = vld [vmem:[#allocation2 + $0x268] sm:$0xff]
        %v1043 = vld [vmem:[#allocation2 + $0x270] sm:$0xff]
        %v1044 = vld [vmem:[#allocation2 + $0x278] sm:$0xff]
        %v1045 = vld [vmem:[#allocation2 + $0x280] sm:$0xf]
        %v1046 = vld [vmem:[#allocation2 + $0x288] sm:$0xf]
        %v1047 = vmin.f32 %v965, %v966
        %1048 = vmin.xlane.f32.xlu0 %v1047
        %v1049 = vpop.xlane.xlu0 %1048
        %v1050 = vmin.f32 %v967, %v968
        %1051 = vmin.xlane.f32.xlu0 %v1050
        %v1052 = vpop.xlane.xlu0 %1051
        %v1053 = vmin.f32 %v969, %v970
        %1054 = vmin.xlane.f32.xlu0 %v1053
        %v1055 = vpop.xlane.xlu0 %1054
        %v1056 = vmin.f32 %v971, %v972
        %1057 = vmin.xlane.f32.xlu0 %v1056
        %v1058 = vpop.xlane.xlu0 %1057
        %v1059 = vmin.f32 %v973, %v974
        %1060 = vmin.xlane.f32.xlu0 %v1059
        %v1061 = vpop.xlane.xlu0 %1060
        %v1062 = vmin.f32 %v975, %v976
        %1063 = vmin.xlane.f32.xlu0 %v1062
        %v1064 = vpop.xlane.xlu0 %1063
        %v1065 = vmin.f32 %v977, %v978
        %1066 = vmin.xlane.f32.xlu0 %v1065
        %v1067 = vpop.xlane.xlu0 %1066
        %v1068 = vmin.f32 %v979, %v980
        %1069 = vmin.xlane.f32.xlu0 %v1068
        %v1070 = vpop.xlane.xlu0 %1069
        %v1071 = vmin.f32 %v981, %v982
        %1072 = vmin.xlane.f32.xlu0 %v1071
        %v1073 = vpop.xlane.xlu0 %1072
        %v1074 = vmin.f32 %v983, %v984
        %1075 = vmin.xlane.f32.xlu0 %v1074
        %v1076 = vpop.xlane.xlu0 %1075
        %v1077 = vmin.f32 %v985, %v986
        %1078 = vmin.xlane.f32.xlu0 %v1077
        %v1079 = vpop.xlane.xlu0 %1078
        %v1080 = vmin.f32 %v987, %v988
        %1081 = vmin.xlane.f32.xlu0 %v1080
        %v1082 = vpop.xlane.xlu0 %1081
        %v1083 = vmin.f32 %v989, %v990
        %1084 = vmin.xlane.f32.xlu0 %v1083
        %v1085 = vpop.xlane.xlu0 %1084
        %v1086 = vmin.f32 %v991, %v992
        %1087 = vmin.xlane.f32.xlu0 %v1086
        %v1088 = vpop.xlane.xlu0 %1087
        %v1089 = vmin.f32 %v993, %v994
        %1090 = vmin.xlane.f32.xlu0 %v1089
        %v1091 = vpop.xlane.xlu0 %1090
        %v1092 = vmin.f32 %v995, %v996
        %1093 = vmin.xlane.f32.xlu0 %v1092
        %v1094 = vpop.xlane.xlu0 %1093
        %v1095 = vmin.f32 %v997, %v998
        %1096 = vmin.xlane.f32.xlu0 %v1095
        %v1097 = vpop.xlane.xlu0 %1096
        %v1098 = vmin.f32 %v999, %v1000
        %1099 = vmin.xlane.f32.xlu0 %v1098
        %v1100 = vpop.xlane.xlu0 %1099
        %v1101 = vmin.f32 %v1001, %v1002
        %1102 = vmin.xlane.f32.xlu0 %v1101
        %v1103 = vpop.xlane.xlu0 %1102
        %v1104 = vmin.f32 %v1003, %v1004
        %1105 = vmin.xlane.f32.xlu0 %v1104
        %v1106 = vpop.xlane.xlu0 %1105
        %v1107 = vmin.f32 %v1005, %v1006
        %1108 = vmin.xlane.f32.xlu0 %v1107
        %v1109 = vpop.xlane.xlu0 %1108
        %v1110 = vmin.f32 %v1007, %v1008
        %1111 = vmin.xlane.f32.xlu0 %v1110
        %v1112 = vpop.xlane.xlu0 %1111
        %v1113 = vmin.f32 %v1009, %v1010
        %1114 = vmin.xlane.f32.xlu0 %v1113
        %v1115 = vpop.xlane.xlu0 %1114
        %v1116 = vmin.f32 %v1011, %v1012
        %1117 = vmin.xlane.f32.xlu0 %v1116
        %v1118 = vpop.xlane.xlu0 %1117
        %v1119 = vmin.f32 %v1013, %v1014
        %1120 = vmin.xlane.f32.xlu0 %v1119
        %v1121 = vpop.xlane.xlu0 %1120
        %v1122 = vmin.f32 %v1015, %v1016
        %1123 = vmin.xlane.f32.xlu0 %v1122
        %v1124 = vpop.xlane.xlu0 %1123
        %v1125 = vmin.f32 %v1017, %v1018
        %1126 = vmin.xlane.f32.xlu0 %v1125
        %v1127 = vpop.xlane.xlu0 %1126
        %v1128 = vmin.f32 %v1019, %v1020
        %1129 = vmin.xlane.f32.xlu0 %v1128
        %v1130 = vpop.xlane.xlu0 %1129
        %v1131 = vmin.f32 %v1021, %v1022
        %1132 = vmin.xlane.f32.xlu0 %v1131
        %v1133 = vpop.xlane.xlu0 %1132
        %v1134 = vmin.f32 %v1023, %v1024
        %1135 = vmin.xlane.f32.xlu0 %v1134
        %v1136 = vpop.xlane.xlu0 %1135
        %v1137 = vmin.f32 %v1025, %v1026
        %1138 = vmin.xlane.f32.xlu0 %v1137
        %v1139 = vpop.xlane.xlu0 %1138
        %v1140 = vmin.f32 %v1027, %v1028
        %1141 = vmin.xlane.f32.xlu0 %v1140
        %v1142 = vpop.xlane.xlu0 %1141
        %v1143 = vmin.f32 %v1029, %v1030
        %1144 = vmin.xlane.f32.xlu0 %v1143
        %v1145 = vpop.xlane.xlu0 %1144
        %v1146 = vmin.f32 %v1031, %v1032
        %1147 = vmin.xlane.f32.xlu0 %v1146
        %v1148 = vpop.xlane.xlu0 %1147
        %v1149 = vmin.f32 %v1033, %v1034
        %1150 = vmin.xlane.f32.xlu0 %v1149
        %v1151 = vpop.xlane.xlu0 %1150
        %v1152 = vmin.f32 %v1035, %v1036
        %1153 = vmin.xlane.f32.xlu0 %v1152
        %v1154 = vpop.xlane.xlu0 %1153
        %v1155 = vmin.f32 %v1037, %v1038
        %1156 = vmin.xlane.f32.xlu0 %v1155
        %v1157 = vpop.xlane.xlu0 %1156
        %v1158 = vmin.f32 %v1039, %v1040
        %1159 = vmin.xlane.f32.xlu0 %v1158
        %v1160 = vpop.xlane.xlu0 %1159
        %v1161 = vmin.f32 %v1041, %v1042
        %1162 = vmin.xlane.f32.xlu0 %v1161
        %v1163 = vpop.xlane.xlu0 %1162
        %v1164 = vmin.f32 %v1043, %v1044
        %1165 = vmin.xlane.f32.xlu0 %v1164
        %v1166 = vpop.xlane.xlu0 %1165
        %vm1167 = vcmask 1043456
        %v1168 = vsel %vm1167, %v1045, inf
        %v1169 = vsel %vm1167, %v1046, inf
        %v1170 = vmin.f32 %v1168, %v1169
        %1171 = vmin.xlane.f32.xlu0 %v1170
        %v1172 = vpop.xlane.xlu0 %1171
        %vm1173 = vcmp.ge.f32.partialorder %v1049, 5e+29
        %vm1174 = vcmp.ge.f32.partialorder %v1052, 5e+29
        %vm1175 = vcmp.ge.f32.partialorder %v1055, 5e+29
        %vm1176 = vcmp.ge.f32.partialorder %v1058, 5e+29
        %vm1177 = vcmp.ge.f32.partialorder %v1061, 5e+29
        %vm1178 = vcmp.ge.f32.partialorder %v1064, 5e+29
        %vm1179 = vcmp.ge.f32.partialorder %v1067, 5e+29
        %vm1180 = vcmp.ge.f32.partialorder %v1070, 5e+29
        %vm1181 = vcmp.ge.f32.partialorder %v1073, 5e+29
        %vm1182 = vcmp.ge.f32.partialorder %v1076, 5e+29
        %vm1183 = vcmp.ge.f32.partialorder %v1079, 5e+29
        %vm1184 = vcmp.ge.f32.partialorder %v1082, 5e+29
        %vm1185 = vcmp.ge.f32.partialorder %v1085, 5e+29
        %vm1186 = vcmp.ge.f32.partialorder %v1088, 5e+29
        %vm1187 = vcmp.ge.f32.partialorder %v1091, 5e+29
        %vm1188 = vcmp.ge.f32.partialorder %v1094, 5e+29
        %vm1189 = vcmp.ge.f32.partialorder %v1097, 5e+29
        %vm1190 = vcmp.ge.f32.partialorder %v1100, 5e+29
        %vm1191 = vcmp.ge.f32.partialorder %v1103, 5e+29
        %vm1192 = vcmp.ge.f32.partialorder %v1106, 5e+29
        %vm1193 = vcmp.ge.f32.partialorder %v1109, 5e+29
        %vm1194 = vcmp.ge.f32.partialorder %v1112, 5e+29
        %vm1195 = vcmp.ge.f32.partialorder %v1115, 5e+29
        %vm1196 = vcmp.ge.f32.partialorder %v1118, 5e+29
        %vm1197 = vcmp.ge.f32.partialorder %v1121, 5e+29
        %vm1198 = vcmp.ge.f32.partialorder %v1124, 5e+29
        %vm1199 = vcmp.ge.f32.partialorder %v1127, 5e+29
        %vm1200 = vcmp.ge.f32.partialorder %v1130, 5e+29
        %vm1201 = vcmp.ge.f32.partialorder %v1133, 5e+29
        %vm1202 = vcmp.ge.f32.partialorder %v1136, 5e+29
        %vm1203 = vcmp.ge.f32.partialorder %v1139, 5e+29
        %vm1204 = vcmp.ge.f32.partialorder %v1142, 5e+29
        %vm1205 = vcmp.ge.f32.partialorder %v1145, 5e+29
        %vm1206 = vcmp.ge.f32.partialorder %v1148, 5e+29
        %vm1207 = vcmp.ge.f32.partialorder %v1151, 5e+29
        %vm1208 = vcmp.ge.f32.partialorder %v1154, 5e+29
        %vm1209 = vcmp.ge.f32.partialorder %v1157, 5e+29
        %vm1210 = vcmp.ge.f32.partialorder %v1160, 5e+29
        %vm1211 = vcmp.ge.f32.partialorder %v1163, 5e+29
        %vm1212 = vcmp.ge.f32.partialorder %v1166, 5e+29
        %vm1213 = vcmp.ge.f32.partialorder %v1172, 5e+29
        %v1214 = vsel %vm1173, 0.0, %v1049
        %v1215 = vsel %vm1174, 0.0, %v1052
        %v1216 = vsel %vm1175, 0.0, %v1055
        %v1217 = vsel %vm1176, 0.0, %v1058
        %v1218 = vsel %vm1177, 0.0, %v1061
        %v1219 = vsel %vm1178, 0.0, %v1064
        %v1220 = vsel %vm1179, 0.0, %v1067
        %v1221 = vsel %vm1180, 0.0, %v1070
        %v1222 = vsel %vm1181, 0.0, %v1073
        %v1223 = vsel %vm1182, 0.0, %v1076
        %v1224 = vsel %vm1183, 0.0, %v1079
        %v1225 = vsel %vm1184, 0.0, %v1082
        %v1226 = vsel %vm1185, 0.0, %v1085
        %v1227 = vsel %vm1186, 0.0, %v1088
        %v1228 = vsel %vm1187, 0.0, %v1091
        %v1229 = vsel %vm1188, 0.0, %v1094
        %v1230 = vsel %vm1189, 0.0, %v1097
        %v1231 = vsel %vm1190, 0.0, %v1100
        %v1232 = vsel %vm1191, 0.0, %v1103
        %v1233 = vsel %vm1192, 0.0, %v1106
        %v1234 = vsel %vm1193, 0.0, %v1109
        %v1235 = vsel %vm1194, 0.0, %v1112
        %v1236 = vsel %vm1195, 0.0, %v1115
        %v1237 = vsel %vm1196, 0.0, %v1118
        %v1238 = vsel %vm1197, 0.0, %v1121
        %v1239 = vsel %vm1198, 0.0, %v1124
        %v1240 = vsel %vm1199, 0.0, %v1127
        %v1241 = vsel %vm1200, 0.0, %v1130
        %v1242 = vsel %vm1201, 0.0, %v1133
        %v1243 = vsel %vm1202, 0.0, %v1136
        %v1244 = vsel %vm1203, 0.0, %v1139
        %v1245 = vsel %vm1204, 0.0, %v1142
        %v1246 = vsel %vm1205, 0.0, %v1145
        %v1247 = vsel %vm1206, 0.0, %v1148
        %v1248 = vsel %vm1207, 0.0, %v1151
        %v1249 = vsel %vm1208, 0.0, %v1154
        %v1250 = vsel %vm1209, 0.0, %v1157
        %v1251 = vsel %vm1210, 0.0, %v1160
        %v1252 = vsel %vm1211, 0.0, %v1163
        %v1253 = vsel %vm1212, 0.0, %v1166
        %v1254 = vsel %vm1213, 0.0, %v1172
        %vm1255 = vcmask 7168
        %1256 = vst.msk [vmem:[%s156] sm:$0xff] %vm1255, %v1214
        %1257 = vst.msk [vmem:[%s156 + $0x8] sm:$0xff] %vm1255, %v1215
        %1258 = vst.msk [vmem:[%s156 + $0x10] sm:$0xff] %vm1255, %v1216
        %1259 = vst.msk [vmem:[%s156 + $0x18] sm:$0xff] %vm1255, %v1217
        %1260 = vst.msk [vmem:[%s156 + $0x20] sm:$0xff] %vm1255, %v1218
        %1261 = vst.msk [vmem:[%s156 + $0x28] sm:$0xff] %vm1255, %v1219
        %1262 = vst.msk [vmem:[%s156 + $0x30] sm:$0xff] %vm1255, %v1220
        %1263 = vst.msk [vmem:[%s156 + $0x38] sm:$0xff] %vm1255, %v1221
        %1264 = vst.msk [vmem:[%s156 + $0x40] sm:$0xff] %vm1255, %v1222
        %1265 = vst.msk [vmem:[%s156 + $0x48] sm:$0xff] %vm1255, %v1223
        %1266 = vst.msk [vmem:[%s156 + $0x50] sm:$0xff] %vm1255, %v1224
        %1267 = vst.msk [vmem:[%s156 + $0x58] sm:$0xff] %vm1255, %v1225
        %1268 = vst.msk [vmem:[%s156 + $0x60] sm:$0xff] %vm1255, %v1226
        %1269 = vst.msk [vmem:[%s156 + $0x68] sm:$0xff] %vm1255, %v1227
        %1270 = vst.msk [vmem:[%s156 + $0x70] sm:$0xff] %vm1255, %v1228
        %1271 = vst.msk [vmem:[%s156 + $0x78] sm:$0xff] %vm1255, %v1229
        %1272 = vst.msk [vmem:[%s156 + $0x80] sm:$0xff] %vm1255, %v1230
        %1273 = vst.msk [vmem:[%s156 + $0x88] sm:$0xff] %vm1255, %v1231
        %1274 = vst.msk [vmem:[%s156 + $0x90] sm:$0xff] %vm1255, %v1232
        %1275 = vst.msk [vmem:[%s156 + $0x98] sm:$0xff] %vm1255, %v1233
        %1276 = vst.msk [vmem:[%s156 + $0xa0] sm:$0xff] %vm1255, %v1234
        %1277 = vst.msk [vmem:[%s156 + $0xa8] sm:$0xff] %vm1255, %v1235
        %1278 = vst.msk [vmem:[%s156 + $0xb0] sm:$0xff] %vm1255, %v1236
        %1279 = vst.msk [vmem:[%s156 + $0xb8] sm:$0xff] %vm1255, %v1237
        %1280 = vst.msk [vmem:[%s156 + $0xc0] sm:$0xff] %vm1255, %v1238
        %1281 = vst.msk [vmem:[%s156 + $0xc8] sm:$0xff] %vm1255, %v1239
        %1282 = vst.msk [vmem:[%s156 + $0xd0] sm:$0xff] %vm1255, %v1240
        %1283 = vst.msk [vmem:[%s156 + $0xd8] sm:$0xff] %vm1255, %v1241
        %1284 = vst.msk [vmem:[%s156 + $0xe0] sm:$0xff] %vm1255, %v1242
        %1285 = vst.msk [vmem:[%s156 + $0xe8] sm:$0xff] %vm1255, %v1243
        %1286 = vst.msk [vmem:[%s156 + $0xf0] sm:$0xff] %vm1255, %v1244
        %1287 = vst.msk [vmem:[%s156 + $0xf8] sm:$0xff] %vm1255, %v1245
        %1288 = vst.msk [vmem:[%s156 + $0x100] sm:$0xff] %vm1255, %v1246
        %1289 = vst.msk [vmem:[%s156 + $0x108] sm:$0xff] %vm1255, %v1247
        %1290 = vst.msk [vmem:[%s156 + $0x110] sm:$0xff] %vm1255, %v1248
        %1291 = vst.msk [vmem:[%s156 + $0x118] sm:$0xff] %vm1255, %v1249
        %1292 = vst.msk [vmem:[%s156 + $0x120] sm:$0xff] %vm1255, %v1250
        %1293 = vst.msk [vmem:[%s156 + $0x128] sm:$0xff] %vm1255, %v1251
        %1294 = vst.msk [vmem:[%s156 + $0x130] sm:$0xff] %vm1255, %v1252
        %1295 = vst.msk [vmem:[%s156 + $0x138] sm:$0xff] %vm1255, %v1253
        %vm1296 = vcmask 3072
        %1297 = vst.msk [vmem:[%s156 + $0x140] sm:$0xf] %vm1296, %v1254
      $region32: #{tpu_custom_call.1} parent=23 // pred_fallthru
        _
      %p1298 = scmp.lt.s32.totalorder %s28, 1
      %s1299 = scalar_select %p1298, %s28, 1
      %s1300 = smul.addr %s1299, 41
      %s1301 = smul.addr %s1300, 8
      %s1302 = scalar_lea.vmem %s3, %s1301
      // Predicated region
      $region33: #{tpu_custom_call.1} parent=23 // pred_check
        %p1303 = pneg %p82
      $region34: #{tpu_custom_call.1} parent=23 // pred_check_branch
        %1305 = sbr.rel (%p1303) target = $region36
      $region35: #{tpu_custom_call.1} parent=23 // pred_region
        _
      $region36: #{tpu_custom_call.1} parent=23 // pred_fallthru
        _
    $region24: #{tpu_custom_call.1} parent=5 // pred_fallthru
      _
    %p1306 = scmp.le.s32.totalorder 2, %s19
    // Predicated region
    $region37: #{tpu_custom_call.1} parent=5 // pred_check
      %p1307 = pneg %p1306
    $region38: #{tpu_custom_call.1} parent=5 // pred_check_branch
      %1309 = sbr.rel (%p1307) target = $region40
    $region39: #{tpu_custom_call.1} parent=5 // pred_region
      %s1310 = ssub.s32 %s19, 2
      // Predicated region
      $region41: #{tpu_custom_call.1} parent=39 // pred_check
        %p1311 = pneg %p88
      $region42: #{tpu_custom_call.1} parent=39 // pred_check_branch
        %1313 = sbr.rel (%p1311) target = $region44
      $region43: #{tpu_custom_call.1} parent=39 // pred_region
        %p1314 = scmp.lt.s32.totalorder %s30, 1
        %s1315 = scalar_select %p1314, %s30, 1
        %s1316 = smul.addr %s1315, 41
        %s1317 = smul.addr %s1316, 8
        %s1318 = scalar_lea.vmem %s3, %s1317
      $region44: #{tpu_custom_call.1} parent=39 // pred_fallthru
        _
    $region40: #{tpu_custom_call.1} parent=5 // pred_fallthru
      _
  $region6: #{tpu_custom_call.1} parent=0 // loop_footer
    %s23 = sadd.s32 1, %s19
  $region7: #{tpu_custom_call.1} parent=0 // loop_footer_branch
    %18 = sbr.rel target = $region3
  $region8: #{tpu_custom_call.1} parent=0 // loop_exit
    _

</llo_original>
